<compile_context>
chip_gen: v7x
topology: tpu7x:2x2x1
jax: 0.10.0
libtpu: 0.0.40
codegen_flags: <defaults>
</compile_context>

<pallas_src>
import functools

import jax
import jax.numpy as jnp
from jax.experimental import pallas as pl
from jax.experimental.pallas import tpu as pltpu


LANE = 128          # lane width: feature dims padded to multiples of this
NODE_TILE = 256     # node-dim tile (MXU-aligned on v5e/v6e/v7x)
VMEM_LIMIT = 32 * 1024 * 1024


def _round_up(x, m):
    return (x + m - 1) // m * m


def _feat_tile(dim_padded):
    # prefer 256-wide tiles (v6e/v7x MXU), fall back to 128 (still v5e-aligned)
    return 256 if dim_padded % 256 == 0 else 128


# ----------------------------------------------------------------------------
# Kernel 1: plain tiled matmul with f32 accumulator (used for XW = H @ W)
# ----------------------------------------------------------------------------
def matmul_kernel(x_ref, w_ref, o_ref, acc_ref):
    @pl.when(pl.program_id(2) == 0)
    def _():
        acc_ref[...] = jnp.zeros_like(acc_ref)

    acc_ref[...] += jnp.dot(x_ref[...], w_ref[...],
                            preferred_element_type=jnp.float32)

    @pl.when(pl.program_id(2) == pl.num_programs(2) - 1)
    def _():
        o_ref[...] = acc_ref[...].astype(o_ref.dtype)


def matmul_xw(h_pad, w_pad):
    n_pad, f_in_pad = h_pad.shape
    f_out_pad = w_pad.shape[1]
    tm = NODE_TILE
    tn = _feat_tile(f_out_pad)
    tk = _feat_tile(f_in_pad)
    grid = (n_pad // tm, f_out_pad // tn, f_in_pad // tk)
    return pl.pallas_call(
        matmul_kernel,
        out_shape=jax.ShapeDtypeStruct((n_pad, f_out_pad), jnp.bfloat16),
        grid_spec=pltpu.PrefetchScalarGridSpec(
            num_scalar_prefetch=0,
            grid=grid,
            in_specs=[
                pl.BlockSpec((tm, tk), lambda i, j, k: (i, k)),
                pl.BlockSpec((tk, tn), lambda i, j, k: (k, j)),
            ],
            out_specs=pl.BlockSpec((tm, tn), lambda i, j, k: (i, j)),
            scratch_shapes=[pltpu.VMEM((tm, tn), jnp.float32)],
        ),
        compiler_params=pltpu.CompilerParams(
            dimension_semantics=("parallel", "parallel", "arbitrary"),
            vmem_limit_bytes=VMEM_LIMIT,
        ),
    )(h_pad, w_pad)


# ----------------------------------------------------------------------------
# Kernel 2: H' = A_hat @ XW + b with fused activation in the epilogue
# ----------------------------------------------------------------------------
def aggregate_kernel(a_ref, xw_ref, b_ref, o_ref, acc_ref, *,
                     activation, valid_cols):
    k = pl.program_id(2)

    @pl.when(k == 0)
    def _():
        acc_ref[...] = jnp.zeros_like(acc_ref)

    acc_ref[...] += jnp.dot(a_ref[...], xw_ref[...],
                            preferred_element_type=jnp.float32)

    @pl.when(k == pl.num_programs(2) - 1)
    def _():
        h = acc_ref[...] + b_ref[...]
        if activation == "relu":
            h = jnp.maximum(h, 0.0)
        elif activation == "log_softmax":
            # mask lane-padding so it does not contribute to the softmax sum
            col = jax.lax.broadcasted_iota(jnp.int32, h.shape, 1)
            valid = col < valid_cols
            h = jnp.where(valid, h, jnp.float32(-1e30))
            m = jnp.max(h, axis=1, keepdims=True)
            s = h - m
            lse = jnp.log(jnp.sum(jnp.exp(s), axis=1, keepdims=True))
            h = jnp.where(valid, s - lse, 0.0)
        # activation == "none": identity
        o_ref[...] = h.astype(o_ref.dtype)


def aggregate(a_hat_pad, xw_pad, b_pad, activation, valid_cols, out_dtype):
    n_pad = a_hat_pad.shape[0]
    f_out_pad = xw_pad.shape[1]
    tm = NODE_TILE
    tk = NODE_TILE
    tn = _feat_tile(f_out_pad)
    if activation == "log_softmax":
        # the feature reduction of log_softmax must live in a single j tile
        assert tn == f_out_pad, "log_softmax needs the full feature dim in one tile"
    grid = (n_pad // tm, f_out_pad // tn, n_pad // tk)
    kernel = functools.partial(aggregate_kernel,
                               activation=activation, valid_cols=valid_cols)
    return pl.pallas_call(
        kernel,
        out_shape=jax.ShapeDtypeStruct((n_pad, f_out_pad), out_dtype),
        grid_spec=pltpu.PrefetchScalarGridSpec(
            num_scalar_prefetch=0,
            grid=grid,
            in_specs=[
                pl.BlockSpec((tm, tk), lambda i, j, k: (i, k)),   # A_hat tile
                pl.BlockSpec((tk, tn), lambda i, j, k: (k, j)),   # XW tile
                pl.BlockSpec((1, tn), lambda i, j, k: (0, j)),    # bias row
            ],
            out_specs=pl.BlockSpec((tm, tn), lambda i, j, k: (i, j)),
            scratch_shapes=[pltpu.VMEM((tm, tn), jnp.float32)],
        ),
        compiler_params=pltpu.CompilerParams(
            dimension_semantics=("parallel", "parallel", "arbitrary"),
            vmem_limit_bytes=VMEM_LIMIT,
        ),
    )(a_hat_pad, xw_pad, b_pad)


# ----------------------------------------------------------------------------
# Glue: dense normalized adjacency A_hat = D^{-1/2} (A + I_remaining) D^{-1/2}
# ----------------------------------------------------------------------------
def build_normalized_adjacency(edge_index, num_nodes):
    src = edge_index[0]
    dst = edge_index[1]
    a = jnp.zeros((num_nodes, num_nodes), dtype=jnp.float32)
    # scatter-ADD: duplicate edges accumulate (PyG scatter semantics)
    a = a.at[dst, src].add(1.0)
    # add_remaining_self_loops: only add a self loop where none exists
    diag = jnp.diagonal(a)
    a = a + jnp.diag(jnp.where(diag > 0, 0.0, 1.0))
    deg = jnp.sum(a, axis=1)
    d_inv_sqrt = jnp.where(deg > 0, jax.lax.rsqrt(deg), 0.0)
    return d_inv_sqrt[:, None] * a * d_inv_sqrt[None, :]


# ----------------------------------------------------------------------------
# GCN model
# ----------------------------------------------------------------------------
def init_gcn_params(key, in_size, hid_size, out_size, num_layers):
    sizes = [(in_size, hid_size)]
    sizes += [(hid_size, hid_size)] * (num_layers - 2)
    sizes += [(hid_size, out_size)]
    params = []
    for (fi, fo) in sizes:
        key, kw = jax.random.split(key)
        scale = 1.0 / jnp.sqrt(jnp.float32(fi))
        w = jax.random.uniform(kw, (fi, fo), jnp.float32, -scale, scale)
        b = jnp.zeros((fo,), jnp.float32)
        params.append((w, b))
    return params


@functools.partial(jax.jit, static_argnames=("num_nodes",))
def gcn_forward(params, edge_index, features, num_nodes):
    n = num_nodes
    n_pad = _round_up(n, NODE_TILE)
    f_out_final = params[-1][0].shape[1]

    a_hat = build_normalized_adjacency(edge_index, n)
    a_hat_pad = jnp.pad(a_hat, ((0, n_pad - n), (0, n_pad - n))).astype(jnp.bfloat16)

    f_in = features.shape[1]
    f_in_pad = _round_up(f_in, LANE)
    h_pad = jnp.pad(features,
                    ((0, n_pad - n), (0, f_in_pad - f_in))).astype(jnp.bfloat16)

    num_layers = len(params)
    for li, (w, b) in enumerate(params):
        fi, fo = w.shape
        fi_pad = h_pad.shape[1]
        fo_pad = _round_up(fo, LANE)
        w_pad = jnp.pad(w, ((0, fi_pad - fi), (0, fo_pad - fo))).astype(jnp.bfloat16)
        b_pad = jnp.pad(b, (0, fo_pad - fo)).astype(jnp.float32).reshape(1, fo_pad)

        # 1) XW = H @ W  (hoisted, computed once per layer)
        xw = matmul_xw(h_pad, w_pad)                       # (n_pad, fo_pad) bf16

        # 2) H' = A_hat @ XW + b, fused activation
        last = (li == num_layers - 1)
        activation = "log_softmax" if last else "relu"     # dropout: identity (eval)
        out_dtype = jnp.float32 if last else jnp.bfloat16
        h_pad = aggregate(a_hat_pad, xw, b_pad, activation, fo, out_dtype)

    return h_pad[:n, :f_out_final]


# ----------------------------------------------------------------------------
# Demo
# ----------------------------------------------------------------------------
if __name__ == "__main__":
    N_NODES = 64
    N_EDGES = 256
    IN_SIZE, HID_SIZE, OUT_SIZE = 16, 32, 8
    NUM_LAYERS = 3

    key = jax.random.PRNGKey(0)
    k_feat, k_src, k_dst, k_param = jax.random.split(key, 4)

    features = jax.random.normal(k_feat, (N_NODES, IN_SIZE), jnp.float32)
    edge_index = jnp.stack(
        [
            jax.random.randint(k_src, (N_EDGES,), 0, N_NODES),
            jax.random.randint(k_dst, (N_EDGES,), 0, N_NODES),
        ],
        axis=0,
    ).astype(jnp.int32)

    params = init_gcn_params(k_param, IN_SIZE, HID_SIZE, OUT_SIZE, NUM_LAYERS)

    out = gcn_forward(params, edge_index, features, N_NODES)
    out = jax.block_until_ready(out)

    assert out.shape == (N_NODES, OUT_SIZE)
    assert bool(jnp.all(jnp.isfinite(out)))
    # each row of log_softmax must sum (in prob space) to ~1
    assert bool(jnp.allclose(jnp.sum(jnp.exp(out), axis=1), 1.0, atol=1e-3))
    print("KERNEL_OK")
</pallas_src>

<mosaic_0001>
module attributes {stable_mosaic.version = 11 : i64} {
  func.func private @main(%arg0: i32) attributes {dimension_semantics = [#tpu.dimension_semantics<core_parallel>], iteration_bounds = array<i64: 2>, tpu.core_type = #tpu.core_type<sc_scalar_subcore>, window_params = []} {
    return
  }
}

module attributes {stable_mosaic.version = 11 : i64} {
  func.func private @main(%arg0: i32) attributes {dimension_semantics = [#tpu.dimension_semantics<core_parallel>], iteration_bounds = array<i64: 2>, tpu.core_type = #tpu.core_type<sc_scalar_subcore>, window_params = []} {
    return
  }
}

module attributes {stable_mosaic.version = 11 : i64} {
  func.func @matmul_kernel(%arg0: i32, %arg1: i32, %arg2: i32, %arg3: memref<256x128xbf16, #tpu.memory_space<vmem>>, %arg4: memref<128x128xbf16, #tpu.memory_space<vmem>>, %arg5: memref<256x128xbf16, #tpu.memory_space<vmem>>, %arg6: memref<256x128xf32, #tpu.memory_space<vmem>>) attributes {dimension_semantics = [#tpu.dimension_semantics<parallel>, #tpu.dimension_semantics<parallel>, #tpu.dimension_semantics<arbitrary>], iteration_bounds = array<i64: 1, 1, 1>, scalar_prefetch = 0 : i64, scratch_operands = 1 : i64, tpu.core_type = #tpu.core_type<tc>, window_params = [{transform_indices = @transform_0, window_bounds = array<i64: 256, 128>}, {transform_indices = @transform_1, window_bounds = array<i64: 128, 128>}, {transform_indices = @transform_2, window_bounds = array<i64: 256, 128>}]} {
    %c0_i32 = arith.constant 0 : i32
    %0 = arith.cmpi eq, %arg2, %c0_i32 : i32
    %1 = arith.extui %0 : i1 to i32
    %c0_i32_0 = arith.constant 0 : i32
    %2 = arith.cmpi ne, %1, %c0_i32_0 : i32
    scf.if %2 {
      %cst_10 = arith.constant 0.000000e+00 : f32
      %12 = vector.broadcast %cst_10 : f32 to vector<256x128xf32>
      %c0_11 = arith.constant 0 : index
      %c0_12 = arith.constant 0 : index
      %13 = vector.load %arg6[%c0_11, %c0_12] : memref<256x128xf32, #tpu.memory_space<vmem>>, vector<256x128xf32>
      tpu.vector_store %arg6[%c0_11, %c0_12], %12 {strides = array<i32>} : memref<256x128xf32, #tpu.memory_space<vmem>>, vector<256x128xf32>,
    } else {
    }
    %c0 = arith.constant 0 : index
    %c0_1 = arith.constant 0 : index
    %3 = vector.load %arg6[%c0, %c0_1] : memref<256x128xf32, #tpu.memory_space<vmem>>, vector<256x128xf32>
    %c0_2 = arith.constant 0 : index
    %c0_3 = arith.constant 0 : index
    %4 = vector.load %arg3[%c0_2, %c0_3] : memref<256x128xbf16, #tpu.memory_space<vmem>>, vector<256x128xbf16>
    %c0_4 = arith.constant 0 : index
    %c0_5 = arith.constant 0 : index
    %5 = vector.load %arg4[%c0_4, %c0_5] : memref<128x128xbf16, #tpu.memory_space<vmem>>, vector<128x128xbf16>
    %cst = arith.constant dense<0.000000e+00> : vector<256x128xf32>
    %6 = tpu.matmul %4, %5, %cst {dimension_numbers = #tpu.dot_dimension_numbers<[1], [0], [0], [1], [0, 0, 1, 1], [], []>} : vector<256x128xbf16>, vector<128x128xbf16>, vector<256x128xf32> -> vector<256x128xf32>
    %7 = arith.addf %3, %6 : vector<256x128xf32>
    %c0_6 = arith.constant 0 : index
    %c0_7 = arith.constant 0 : index
    %8 = vector.load %arg6[%c0_6, %c0_7] : memref<256x128xf32, #tpu.memory_space<vmem>>, vector<256x128xf32>
    tpu.vector_store %arg6[%c0_6, %c0_7], %7 {strides = array<i32>} : memref<256x128xf32, #tpu.memory_space<vmem>>, vector<256x128xf32>,
    %c0_i32_8 = arith.constant 0 : i32
    %9 = arith.cmpi eq, %arg2, %c0_i32_8 : i32
    %10 = arith.extui %9 : i1 to i32
    %c0_i32_9 = arith.constant 0 : i32
    %11 = arith.cmpi ne, %10, %c0_i32_9 : i32
    scf.if %11 {
      %c0_10 = arith.constant 0 : index
      %c0_11 = arith.constant 0 : index
      %12 = vector.load %arg6[%c0_10, %c0_11] : memref<256x128xf32, #tpu.memory_space<vmem>>, vector<256x128xf32>
      %13 = arith.truncf %12 : vector<256x128xf32> to vector<256x128xbf16>
      %c0_12 = arith.constant 0 : index
      %c0_13 = arith.constant 0 : index
      %14 = vector.load %arg5[%c0_12, %c0_13] : memref<256x128xbf16, #tpu.memory_space<vmem>>, vector<256x128xbf16>
      tpu.vector_store %arg5[%c0_12, %c0_13], %13 {strides = array<i32>} : memref<256x128xbf16, #tpu.memory_space<vmem>>, vector<256x128xbf16>,
    } else {
    }
    return
  }
  func.func @transform_0(%arg0: i32, %arg1: i32, %arg2: i32) -> (i32, i32) {
    %c0_i32 = arith.constant 0 : i32
    return %arg0, %arg2 : i32, i32
  }
  func.func @transform_1(%arg0: i32, %arg1: i32, %arg2: i32) -> (i32, i32) {
    %c0_i32 = arith.constant 0 : i32
    return %arg2, %arg1 : i32, i32
  }
  func.func @transform_2(%arg0: i32, %arg1: i32, %arg2: i32) -> (i32, i32) {
    %c0_i32 = arith.constant 0 : i32
    return %arg0, %arg1 : i32, i32
  }
}

module attributes {stable_mosaic.version = 11 : i64} {
  func.func @aggregate_kernel(%arg0: i32, %arg1: i32, %arg2: i32, %arg3: memref<256x256xbf16, #tpu.memory_space<vmem>>, %arg4: memref<256x128xbf16, #tpu.memory_space<vmem>>, %arg5: memref<1x128xf32, #tpu.memory_space<vmem>>, %arg6: memref<256x128xf32, #tpu.memory_space<vmem>>, %arg7: memref<256x128xf32, #tpu.memory_space<vmem>>) attributes {dimension_semantics = [#tpu.dimension_semantics<parallel>, #tpu.dimension_semantics<parallel>, #tpu.dimension_semantics<arbitrary>], iteration_bounds = array<i64: 1, 1, 1>, scalar_prefetch = 0 : i64, scratch_operands = 1 : i64, tpu.core_type = #tpu.core_type<tc>, window_params = [{transform_indices = @transform_0, window_bounds = array<i64: 256, 256>}, {transform_indices = @transform_1, window_bounds = array<i64: 256, 128>}, {transform_indices = @transform_2, window_bounds = array<i64: 1, 128>}, {transform_indices = @transform_3, window_bounds = array<i64: 256, 128>}]} {
    %c0_i32 = arith.constant 0 : i32
    %0 = arith.cmpi eq, %arg2, %c0_i32 : i32
    %1 = arith.extui %0 : i1 to i32
    %c0_i32_0 = arith.constant 0 : i32
    %2 = arith.cmpi ne, %1, %c0_i32_0 : i32
    scf.if %2 {
      %cst_10 = arith.constant 0.000000e+00 : f32
      %12 = vector.broadcast %cst_10 : f32 to vector<256x128xf32>
      %c0_11 = arith.constant 0 : index
      %c0_12 = arith.constant 0 : index
      %13 = vector.load %arg7[%c0_11, %c0_12] : memref<256x128xf32, #tpu.memory_space<vmem>>, vector<256x128xf32>
      tpu.vector_store %arg7[%c0_11, %c0_12], %12 {strides = array<i32>} : memref<256x128xf32, #tpu.memory_space<vmem>>, vector<256x128xf32>,
    } else {
    }
    %c0 = arith.constant 0 : index
    %c0_1 = arith.constant 0 : index
    %3 = vector.load %arg7[%c0, %c0_1] : memref<256x128xf32, #tpu.memory_space<vmem>>, vector<256x128xf32>
    %c0_2 = arith.constant 0 : index
    %c0_3 = arith.constant 0 : index
    %4 = vector.load %arg3[%c0_2, %c0_3] : memref<256x256xbf16, #tpu.memory_space<vmem>>, vector<256x256xbf16>
    %c0_4 = arith.constant 0 : index
    %c0_5 = arith.constant 0 : index
    %5 = vector.load %arg4[%c0_4, %c0_5] : memref<256x128xbf16, #tpu.memory_space<vmem>>, vector<256x128xbf16>
    %cst = arith.constant dense<0.000000e+00> : vector<256x128xf32>
    %6 = tpu.matmul %4, %5, %cst {dimension_numbers = #tpu.dot_dimension_numbers<[1], [0], [0], [1], [0, 0, 1, 1], [], []>} : vector<256x256xbf16>, vector<256x128xbf16>, vector<256x128xf32> -> vector<256x128xf32>
    %7 = arith.addf %3, %6 : vector<256x128xf32>
    %c0_6 = arith.constant 0 : index
    %c0_7 = arith.constant 0 : index
    %8 = vector.load %arg7[%c0_6, %c0_7] : memref<256x128xf32, #tpu.memory_space<vmem>>, vector<256x128xf32>
    tpu.vector_store %arg7[%c0_6, %c0_7], %7 {strides = array<i32>} : memref<256x128xf32, #tpu.memory_space<vmem>>, vector<256x128xf32>,
    %c0_i32_8 = arith.constant 0 : i32
    %9 = arith.cmpi eq, %arg2, %c0_i32_8 : i32
    %10 = arith.extui %9 : i1 to i32
    %c0_i32_9 = arith.constant 0 : i32
    %11 = arith.cmpi ne, %10, %c0_i32_9 : i32
    scf.if %11 {
      %c0_10 = arith.constant 0 : index
      %c0_11 = arith.constant 0 : index
      %12 = vector.load %arg7[%c0_10, %c0_11] : memref<256x128xf32, #tpu.memory_space<vmem>>, vector<256x128xf32>
      %c0_12 = arith.constant 0 : index
      %c0_13 = arith.constant 0 : index
      %13 = vector.load %arg5[%c0_12, %c0_13] : memref<1x128xf32, #tpu.memory_space<vmem>>, vector<1x128xf32>
      %14 = vector.broadcast %13 : vector<1x128xf32> to vector<256x128xf32>
      %15 = arith.addf %12, %14 : vector<256x128xf32>
      %16 = tpu.iota {dimensions = array<i32: 1>} : vector<256x128xi32>
      %c8_i32 = arith.constant 8 : i32
      %17 = vector.broadcast %c8_i32 : i32 to vector<256x128xi32>
      %18 = arith.cmpi slt, %16, %17 : vector<256x128xi32>
      %cst_14 = arith.constant -1.000000e+30 : f32
      %19 = vector.broadcast %cst_14 : f32 to vector<256x128xf32>
      %20 = arith.select %18, %15, %19 : vector<256x128xi1>, vector<256x128xf32>
      %cst_15 = arith.constant dense<0xFF800000> : vector<256xf32>
      %21 = vector.multi_reduction <maximumf>, %20, %cst_15 [1] : vector<256x128xf32> to vector<256xf32>
      %22 = vector.shape_cast %21 : vector<256xf32> to vector<256x1xf32>
      %23 = vector.broadcast %22 : vector<256x1xf32> to vector<256x128xf32>
      %24 = arith.subf %20, %23 : vector<256x128xf32>
      %25 = math.exp %24 : vector<256x128xf32>
      %cst_16 = arith.constant dense<0.000000e+00> : vector<256xf32>
      %26 = vector.multi_reduction <add>, %25, %cst_16 [1] : vector<256x128xf32> to vector<256xf32>
      %27 = vector.shape_cast %26 : vector<256xf32> to vector<256x1xf32>
      %28 = math.log %27 : vector<256x1xf32>
      %29 = vector.broadcast %28 : vector<256x1xf32> to vector<256x128xf32>
      %30 = arith.subf %24, %29 : vector<256x128xf32>
      %cst_17 = arith.constant 0.000000e+00 : f32
      %31 = vector.broadcast %cst_17 : f32 to vector<256x128xf32>
      %32 = arith.select %18, %30, %31 : vector<256x128xi1>, vector<256x128xf32>
      %c0_18 = arith.constant 0 : index
      %c0_19 = arith.constant 0 : index
      %33 = vector.load %arg6[%c0_18, %c0_19] : memref<256x128xf32, #tpu.memory_space<vmem>>, vector<256x128xf32>
      tpu.vector_store %arg6[%c0_18, %c0_19], %32 {strides = array<i32>} : memref<256x128xf32, #tpu.memory_space<vmem>>, vector<256x128xf32>,
    } else {
    }
    return
  }
  func.func @transform_0(%arg0: i32, %arg1: i32, %arg2: i32) -> (i32, i32) {
    %c0_i32 = arith.constant 0 : i32
    return %arg0, %arg2 : i32, i32
  }
  func.func @transform_1(%arg0: i32, %arg1: i32, %arg2: i32) -> (i32, i32) {
    %c0_i32 = arith.constant 0 : i32
    return %arg2, %arg1 : i32, i32
  }
  func.func @transform_2(%arg0: i32, %arg1: i32, %arg2: i32) -> (i32, i32) {
    %c0_i32 = arith.constant 0 : i32
    %c0_i32_0 = arith.constant 0 : i32
    return %c0_i32, %arg1 : i32, i32
  }
  func.func @transform_3(%arg0: i32, %arg1: i32, %arg2: i32) -> (i32, i32) {
    %c0_i32 = arith.constant 0 : i32
    return %arg0, %arg1 : i32, i32
  }
}

module attributes {stable_mosaic.version = 11 : i64} {
  func.func @aggregate_kernel(%arg0: i32, %arg1: i32, %arg2: i32, %arg3: memref<256x256xbf16, #tpu.memory_space<vmem>>, %arg4: memref<256x128xbf16, #tpu.memory_space<vmem>>, %arg5: memref<1x128xf32, #tpu.memory_space<vmem>>, %arg6: memref<256x128xbf16, #tpu.memory_space<vmem>>, %arg7: memref<256x128xf32, #tpu.memory_space<vmem>>) attributes {dimension_semantics = [#tpu.dimension_semantics<parallel>, #tpu.dimension_semantics<parallel>, #tpu.dimension_semantics<arbitrary>], iteration_bounds = array<i64: 1, 1, 1>, scalar_prefetch = 0 : i64, scratch_operands = 1 : i64, tpu.core_type = #tpu.core_type<tc>, window_params = [{transform_indices = @transform_0, window_bounds = array<i64: 256, 256>}, {transform_indices = @transform_1, window_bounds = array<i64: 256, 128>}, {transform_indices = @transform_2, window_bounds = array<i64: 1, 128>}, {transform_indices = @transform_3, window_bounds = array<i64: 256, 128>}]} {
    %c0_i32 = arith.constant 0 : i32
    %0 = arith.cmpi eq, %arg2, %c0_i32 : i32
    %1 = arith.extui %0 : i1 to i32
    %c0_i32_0 = arith.constant 0 : i32
    %2 = arith.cmpi ne, %1, %c0_i32_0 : i32
    scf.if %2 {
      %cst_10 = arith.constant 0.000000e+00 : f32
      %12 = vector.broadcast %cst_10 : f32 to vector<256x128xf32>
      %c0_11 = arith.constant 0 : index
      %c0_12 = arith.constant 0 : index
      %13 = vector.load %arg7[%c0_11, %c0_12] : memref<256x128xf32, #tpu.memory_space<vmem>>, vector<256x128xf32>
      tpu.vector_store %arg7[%c0_11, %c0_12], %12 {strides = array<i32>} : memref<256x128xf32, #tpu.memory_space<vmem>>, vector<256x128xf32>,
    } else {
    }
    %c0 = arith.constant 0 : index
    %c0_1 = arith.constant 0 : index
    %3 = vector.load %arg7[%c0, %c0_1] : memref<256x128xf32, #tpu.memory_space<vmem>>, vector<256x128xf32>
    %c0_2 = arith.constant 0 : index
    %c0_3 = arith.constant 0 : index
    %4 = vector.load %arg3[%c0_2, %c0_3] : memref<256x256xbf16, #tpu.memory_space<vmem>>, vector<256x256xbf16>
    %c0_4 = arith.constant 0 : index
    %c0_5 = arith.constant 0 : index
    %5 = vector.load %arg4[%c0_4, %c0_5] : memref<256x128xbf16, #tpu.memory_space<vmem>>, vector<256x128xbf16>
    %cst = arith.constant dense<0.000000e+00> : vector<256x128xf32>
    %6 = tpu.matmul %4, %5, %cst {dimension_numbers = #tpu.dot_dimension_numbers<[1], [0], [0], [1], [0, 0, 1, 1], [], []>} : vector<256x256xbf16>, vector<256x128xbf16>, vector<256x128xf32> -> vector<256x128xf32>
    %7 = arith.addf %3, %6 : vector<256x128xf32>
    %c0_6 = arith.constant 0 : index
    %c0_7 = arith.constant 0 : index
    %8 = vector.load %arg7[%c0_6, %c0_7] : memref<256x128xf32, #tpu.memory_space<vmem>>, vector<256x128xf32>
    tpu.vector_store %arg7[%c0_6, %c0_7], %7 {strides = array<i32>} : memref<256x128xf32, #tpu.memory_space<vmem>>, vector<256x128xf32>,
    %c0_i32_8 = arith.constant 0 : i32
    %9 = arith.cmpi eq, %arg2, %c0_i32_8 : i32
    %10 = arith.extui %9 : i1 to i32
    %c0_i32_9 = arith.constant 0 : i32
    %11 = arith.cmpi ne, %10, %c0_i32_9 : i32
    scf.if %11 {
      %c0_10 = arith.constant 0 : index
      %c0_11 = arith.constant 0 : index
      %12 = vector.load %arg7[%c0_10, %c0_11] : memref<256x128xf32, #tpu.memory_space<vmem>>, vector<256x128xf32>
      %c0_12 = arith.constant 0 : index
      %c0_13 = arith.constant 0 : index
      %13 = vector.load %arg5[%c0_12, %c0_13] : memref<1x128xf32, #tpu.memory_space<vmem>>, vector<1x128xf32>
      %14 = vector.broadcast %13 : vector<1x128xf32> to vector<256x128xf32>
      %15 = arith.addf %12, %14 : vector<256x128xf32>
      %cst_14 = arith.constant 0.000000e+00 : f32
      %16 = vector.broadcast %cst_14 : f32 to vector<256x128xf32>
      %17 = arith.maximumf %15, %16 : vector<256x128xf32>
      %18 = arith.truncf %17 : vector<256x128xf32> to vector<256x128xbf16>
      %c0_15 = arith.constant 0 : index
      %c0_16 = arith.constant 0 : index
      %19 = vector.load %arg6[%c0_15, %c0_16] : memref<256x128xbf16, #tpu.memory_space<vmem>>, vector<256x128xbf16>
      tpu.vector_store %arg6[%c0_15, %c0_16], %18 {strides = array<i32>} : memref<256x128xbf16, #tpu.memory_space<vmem>>, vector<256x128xbf16>,
    } else {
    }
    return
  }
  func.func @transform_0(%arg0: i32, %arg1: i32, %arg2: i32) -> (i32, i32) {
    %c0_i32 = arith.constant 0 : i32
    return %arg0, %arg2 : i32, i32
  }
  func.func @transform_1(%arg0: i32, %arg1: i32, %arg2: i32) -> (i32, i32) {
    %c0_i32 = arith.constant 0 : i32
    return %arg2, %arg1 : i32, i32
  }
  func.func @transform_2(%arg0: i32, %arg1: i32, %arg2: i32) -> (i32, i32) {
    %c0_i32 = arith.constant 0 : i32
    %c0_i32_0 = arith.constant 0 : i32
    return %c0_i32, %arg1 : i32, i32
  }
  func.func @transform_3(%arg0: i32, %arg1: i32, %arg2: i32) -> (i32, i32) {
    %c0_i32 = arith.constant 0 : i32
    return %arg0, %arg1 : i32, i32
  }
}

</mosaic_0001>

<llo_original>
// kernel: gcn_forward.6
$region0: #{gcn_forward.6}
  #allocation0 [shape = 'u32[]', space=smem, size = 0x4, offset = 0x4, fixed_abs, tag = 'smem constant byte address 0x4 - core index']
  #allocation1 [shape = 'u32[144,128]{1,0:T(1,128)}', space=vmem, size = 0x12000, scoped, tag = 'internal scratch']
  #allocation2 [shape = 'f32[256,128]{1,0:T(8,128)}', space=vmem, size = 0x20000, scoped, tag = 'scratch operand']
  %s0 = inlined_call_operand.vmem [shape: bf16[256,128], index: 0, kind: input, shape index: {}]
  %s1 = inlined_call_operand.vmem [shape: bf16[128,128], index: 1, kind: input, shape index: {}]
  %s2 = inlined_call_operand.vmem [shape: bf16[256,128], index: 2, kind: output, shape index: {}]
  %s3 = sld [smem:[#allocation0]]
  $region26: #{gcn_forward.6} parent=0
    _
  %s5 = ssub.s32 1, %s3
  %s6 = scalar_select 0, %s5, %s3
  // Predicated region
  $region2: #{gcn_forward.6} parent=0 // pred_check
    _
  $region3: #{gcn_forward.6} parent=0 // pred_check_branch
    %8 = sbr.rel (0) target = $region5
  $region4: #{gcn_forward.6} parent=0 // pred_region
    _
  $region5: #{gcn_forward.6} parent=0 // pred_fallthru
    _
  // Predicated region
  $region6: #{gcn_forward.6} parent=0 // pred_check
    _
  $region7: #{gcn_forward.6} parent=0 // pred_check_branch
    %10 = sbr.rel (0) target = $region9
  $region8: #{gcn_forward.6} parent=0 // pred_region
    _
  $region9: #{gcn_forward.6} parent=0 // pred_fallthru
    _
  %p12 = scmp.eq.s32.totalorder 0, 0
  // Predicated region
  $region10: #{gcn_forward.6} parent=0 // pred_check
    %p13 = pneg %p12
  $region11: #{gcn_forward.6} parent=0 // pred_check_branch
    %15 = sbr.rel (%p13) target = $region13
  $region12: #{gcn_forward.6} parent=0 // pred_region
    %16 = vst [vmem:[#allocation2] sm:$0xff] 0.0
    %17 = vst [vmem:[#allocation2 + $0x8] sm:$0xff] 0.0
    %18 = vst [vmem:[#allocation2 + $0x10] sm:$0xff] 0.0
    %19 = vst [vmem:[#allocation2 + $0x18] sm:$0xff] 0.0
    %20 = vst [vmem:[#allocation2 + $0x20] sm:$0xff] 0.0
    %21 = vst [vmem:[#allocation2 + $0x28] sm:$0xff] 0.0
    %22 = vst [vmem:[#allocation2 + $0x30] sm:$0xff] 0.0
    %23 = vst [vmem:[#allocation2 + $0x38] sm:$0xff] 0.0
    %24 = vst [vmem:[#allocation2 + $0x40] sm:$0xff] 0.0
    %25 = vst [vmem:[#allocation2 + $0x48] sm:$0xff] 0.0
    %26 = vst [vmem:[#allocation2 + $0x50] sm:$0xff] 0.0
    %27 = vst [vmem:[#allocation2 + $0x58] sm:$0xff] 0.0
    %28 = vst [vmem:[#allocation2 + $0x60] sm:$0xff] 0.0
    %29 = vst [vmem:[#allocation2 + $0x68] sm:$0xff] 0.0
    %30 = vst [vmem:[#allocation2 + $0x70] sm:$0xff] 0.0
    %31 = vst [vmem:[#allocation2 + $0x78] sm:$0xff] 0.0
    %32 = vst [vmem:[#allocation2 + $0x80] sm:$0xff] 0.0
    %33 = vst [vmem:[#allocation2 + $0x88] sm:$0xff] 0.0
    %34 = vst [vmem:[#allocation2 + $0x90] sm:$0xff] 0.0
    %35 = vst [vmem:[#allocation2 + $0x98] sm:$0xff] 0.0
    %36 = vst [vmem:[#allocation2 + $0xa0] sm:$0xff] 0.0
    %37 = vst [vmem:[#allocation2 + $0xa8] sm:$0xff] 0.0
    %38 = vst [vmem:[#allocation2 + $0xb0] sm:$0xff] 0.0
    %39 = vst [vmem:[#allocation2 + $0xb8] sm:$0xff] 0.0
    %40 = vst [vmem:[#allocation2 + $0xc0] sm:$0xff] 0.0
    %41 = vst [vmem:[#allocation2 + $0xc8] sm:$0xff] 0.0
    %42 = vst [vmem:[#allocation2 + $0xd0] sm:$0xff] 0.0
    %43 = vst [vmem:[#allocation2 + $0xd8] sm:$0xff] 0.0
    %44 = vst [vmem:[#allocation2 + $0xe0] sm:$0xff] 0.0
    %45 = vst [vmem:[#allocation2 + $0xe8] sm:$0xff] 0.0
    %46 = vst [vmem:[#allocation2 + $0xf0] sm:$0xff] 0.0
    %47 = vst [vmem:[#allocation2 + $0xf8] sm:$0xff] 0.0
  $region13: #{gcn_forward.6} parent=0 // pred_fallthru
    _
  %v48 = vld [vmem:[#allocation2] sm:$0xff]
  %v49 = vld [vmem:[#allocation2 + $0x8] sm:$0xff]
  %v50 = vld [vmem:[#allocation2 + $0x10] sm:$0xff]
  %v51 = vld [vmem:[#allocation2 + $0x18] sm:$0xff]
  %v52 = vld [vmem:[#allocation2 + $0x20] sm:$0xff]
  %v53 = vld [vmem:[#allocation2 + $0x28] sm:$0xff]
  %v54 = vld [vmem:[#allocation2 + $0x30] sm:$0xff]
  %v55 = vld [vmem:[#allocation2 + $0x38] sm:$0xff]
  %v56 = vld [vmem:[#allocation2 + $0x40] sm:$0xff]
  %v57 = vld [vmem:[#allocation2 + $0x48] sm:$0xff]
  %v58 = vld [vmem:[#allocation2 + $0x50] sm:$0xff]
  %v59 = vld [vmem:[#allocation2 + $0x58] sm:$0xff]
  %v60 = vld [vmem:[#allocation2 + $0x60] sm:$0xff]
  %v61 = vld [vmem:[#allocation2 + $0x68] sm:$0xff]
  %v62 = vld [vmem:[#allocation2 + $0x70] sm:$0xff]
  %v63 = vld [vmem:[#allocation2 + $0x78] sm:$0xff]
  %v64 = vld [vmem:[#allocation2 + $0x80] sm:$0xff]
  %v65 = vld [vmem:[#allocation2 + $0x88] sm:$0xff]
  %v66 = vld [vmem:[#allocation2 + $0x90] sm:$0xff]
  %v67 = vld [vmem:[#allocation2 + $0x98] sm:$0xff]
  %v68 = vld [vmem:[#allocation2 + $0xa0] sm:$0xff]
  %v69 = vld [vmem:[#allocation2 + $0xa8] sm:$0xff]
  %v70 = vld [vmem:[#allocation2 + $0xb0] sm:$0xff]
  %v71 = vld [vmem:[#allocation2 + $0xb8] sm:$0xff]
  %v72 = vld [vmem:[#allocation2 + $0xc0] sm:$0xff]
  %v73 = vld [vmem:[#allocation2 + $0xc8] sm:$0xff]
  %v74 = vld [vmem:[#allocation2 + $0xd0] sm:$0xff]
  %v75 = vld [vmem:[#allocation2 + $0xd8] sm:$0xff]
  %v76 = vld [vmem:[#allocation2 + $0xe0] sm:$0xff]
  %v77 = vld [vmem:[#allocation2 + $0xe8] sm:$0xff]
  %v78 = vld [vmem:[#allocation2 + $0xf0] sm:$0xff]
  %v79 = vld [vmem:[#allocation2 + $0xf8] sm:$0xff]
  %v80 = vld [vmem:[%s0] sm:$0xf]
  %v81 = vld [vmem:[%s0 + $0x4] sm:$0xf]
  %v82 = vld [vmem:[%s0 + $0x8] sm:$0xf]
  %v83 = vld [vmem:[%s0 + $0xc] sm:$0xf]
  %v84 = vld [vmem:[%s0 + $0x10] sm:$0xf]
  %v85 = vld [vmem:[%s0 + $0x14] sm:$0xf]
  %v86 = vld [vmem:[%s0 + $0x18] sm:$0xf]
  %v87 = vld [vmem:[%s0 + $0x1c] sm:$0xf]
  %v88 = vld [vmem:[%s0 + $0x20] sm:$0xf]
  %v89 = vld [vmem:[%s0 + $0x24] sm:$0xf]
  %v90 = vld [vmem:[%s0 + $0x28] sm:$0xf]
  %v91 = vld [vmem:[%s0 + $0x2c] sm:$0xf]
  %v92 = vld [vmem:[%s0 + $0x30] sm:$0xf]
  %v93 = vld [vmem:[%s0 + $0x34] sm:$0xf]
  %v94 = vld [vmem:[%s0 + $0x38] sm:$0xf]
  %v95 = vld [vmem:[%s0 + $0x3c] sm:$0xf]
  %v96 = vld [vmem:[%s0 + $0x40] sm:$0xf]
  %v97 = vld [vmem:[%s0 + $0x44] sm:$0xf]
  %v98 = vld [vmem:[%s0 + $0x48] sm:$0xf]
  %v99 = vld [vmem:[%s0 + $0x4c] sm:$0xf]
  %v100 = vld [vmem:[%s0 + $0x50] sm:$0xf]
  %v101 = vld [vmem:[%s0 + $0x54] sm:$0xf]
  %v102 = vld [vmem:[%s0 + $0x58] sm:$0xf]
  %v103 = vld [vmem:[%s0 + $0x5c] sm:$0xf]
  %v104 = vld [vmem:[%s0 + $0x60] sm:$0xf]
  %v105 = vld [vmem:[%s0 + $0x64] sm:$0xf]
  %v106 = vld [vmem:[%s0 + $0x68] sm:$0xf]
  %v107 = vld [vmem:[%s0 + $0x6c] sm:$0xf]
  %v108 = vld [vmem:[%s0 + $0x70] sm:$0xf]
  %v109 = vld [vmem:[%s0 + $0x74] sm:$0xf]
  %v110 = vld [vmem:[%s0 + $0x78] sm:$0xf]
  %v111 = vld [vmem:[%s0 + $0x7c] sm:$0xf]
  %v112 = vld [vmem:[%s1] sm:$0xf]
  %v113 = vld [vmem:[%s1 + $0x4] sm:$0xf]
  %v114 = vld [vmem:[%s1 + $0x8] sm:$0xf]
  %v115 = vld [vmem:[%s1 + $0xc] sm:$0xf]
  %v116 = vld [vmem:[%s1 + $0x10] sm:$0xf]
  %v117 = vld [vmem:[%s1 + $0x14] sm:$0xf]
  %v118 = vld [vmem:[%s1 + $0x18] sm:$0xf]
  %v119 = vld [vmem:[%s1 + $0x1c] sm:$0xf]
  %v120 = vld [vmem:[%s1 + $0x20] sm:$0xf]
  %v121 = vld [vmem:[%s1 + $0x24] sm:$0xf]
  %v122 = vld [vmem:[%s1 + $0x28] sm:$0xf]
  %v123 = vld [vmem:[%s1 + $0x2c] sm:$0xf]
  %v124 = vld [vmem:[%s1 + $0x30] sm:$0xf]
  %v125 = vld [vmem:[%s1 + $0x34] sm:$0xf]
  %v126 = vld [vmem:[%s1 + $0x38] sm:$0xf]
  %v127 = vld [vmem:[%s1 + $0x3c] sm:$0xf]
  %v160 = vunpack.c.l.b16 %v80
  %v161 = vunpack.c.l.b16 %v81
  %v162 = vunpack.c.l.b16 %v82
  %v163 = vunpack.c.l.b16 %v83
  %v164 = vunpack.c.l.b16 %v84
  %v165 = vunpack.c.l.b16 %v85
  %v166 = vunpack.c.l.b16 %v86
  %v167 = vunpack.c.l.b16 %v87
  %v168 = vunpack.c.l.b16 %v88
  %v169 = vunpack.c.l.b16 %v89
  %v170 = vunpack.c.l.b16 %v90
  %v171 = vunpack.c.l.b16 %v91
  %v172 = vunpack.c.l.b16 %v92
  %v173 = vunpack.c.l.b16 %v93
  %v174 = vunpack.c.l.b16 %v94
  %v175 = vunpack.c.l.b16 %v95
  %v176 = vunpack.c.l.b16 %v96
  %v177 = vunpack.c.l.b16 %v97
  %v178 = vunpack.c.l.b16 %v98
  %v179 = vunpack.c.l.b16 %v99
  %v180 = vunpack.c.l.b16 %v100
  %v181 = vunpack.c.l.b16 %v101
  %v182 = vunpack.c.l.b16 %v102
  %v183 = vunpack.c.l.b16 %v103
  %v184 = vunpack.c.l.b16 %v104
  %v185 = vunpack.c.l.b16 %v105
  %v186 = vunpack.c.l.b16 %v106
  %v187 = vunpack.c.l.b16 %v107
  %v188 = vunpack.c.l.b16 %v108
  %v189 = vunpack.c.l.b16 %v109
  %v190 = vunpack.c.l.b16 %v110
  %v191 = vunpack.c.l.b16 %v111
  %v192 = vpack.c.b16 %v161, %v160
  %v193 = vpack.c.b16 %v163, %v162
  %v194 = vpack.c.b16 %v165, %v164
  %v195 = vpack.c.b16 %v167, %v166
  %v196 = vpack.c.b16 %v169, %v168
  %v197 = vpack.c.b16 %v171, %v170
  %v198 = vpack.c.b16 %v173, %v172
  %v199 = vpack.c.b16 %v175, %v174
  %v200 = vpack.c.b16 %v177, %v176
  %v201 = vpack.c.b16 %v179, %v178
  %v202 = vpack.c.b16 %v181, %v180
  %v203 = vpack.c.b16 %v183, %v182
  %v204 = vpack.c.b16 %v185, %v184
  %v205 = vpack.c.b16 %v187, %v186
  %v206 = vpack.c.b16 %v189, %v188
  %v207 = vpack.c.b16 %v191, %v190
  %v240 = vunpack.c.l.b16 %v112
  %v241 = vunpack.c.l.b16 %v113
  %v242 = vunpack.c.l.b16 %v114
  %v243 = vunpack.c.l.b16 %v115
  %v244 = vunpack.c.l.b16 %v116
  %v245 = vunpack.c.l.b16 %v117
  %v246 = vunpack.c.l.b16 %v118
  %v247 = vunpack.c.l.b16 %v119
  %v248 = vunpack.c.l.b16 %v120
  %v249 = vunpack.c.l.b16 %v121
  %v250 = vunpack.c.l.b16 %v122
  %v251 = vunpack.c.l.b16 %v123
  %v252 = vunpack.c.l.b16 %v124
  %v253 = vunpack.c.l.b16 %v125
  %v254 = vunpack.c.l.b16 %v126
  %v255 = vunpack.c.l.b16 %v127
  %v256 = vpack.c.b16 %v241, %v240
  %v257 = vpack.c.b16 %v243, %v242
  %v258 = vpack.c.b16 %v245, %v244
  %v259 = vpack.c.b16 %v247, %v246
  %v260 = vpack.c.b16 %v249, %v248
  %v261 = vpack.c.b16 %v251, %v250
  %v262 = vpack.c.b16 %v253, %v252
  %v263 = vpack.c.b16 %v255, %v254
  %272 = vmatprep.subr.bf16.mxu0 0
  %273 = vmatpush1.bf16.msra.mxu0 %v256
  %274 = vmatprep.subr.bf16.mxu0 0
  %275 = vmatpush1.bf16.msra.mxu0 %v257
  %276 = vmatprep.subr.bf16.mxu0 0
  %277 = vmatpush1.bf16.msra.mxu0 %v258
  %278 = vmatprep.subr.bf16.mxu0 0
  %279 = vmatpush1.bf16.msra.mxu0 %v259
  %280 = vmatprep.subr.bf16.mxu0 0
  %281 = vmatpush1.bf16.msra.mxu0 %v260
  %282 = vmatprep.subr.bf16.mxu0 0
  %283 = vmatpush1.bf16.msra.mxu0 %v261
  %284 = vmatprep.subr.bf16.mxu0 0
  %285 = vmatpush1.bf16.msra.mxu0 %v262
  %286 = vmatprep.subr.bf16.mxu0 0
  %287 = vmatpush1.bf16.msra.mxu0 %v263
  %288 = vmatprep.subr.bf16.mxu0 0
  %289 = vmatpush1.bf16.msra.mxu0 0
  %290 = vmatprep.subr.bf16.mxu0 0
  %291 = vmatpush1.bf16.msra.mxu0 0
  %292 = vmatprep.subr.bf16.mxu0 0
  %293 = vmatpush1.bf16.msra.mxu0 0
  %294 = vmatprep.subr.bf16.mxu0 0
  %295 = vmatpush1.bf16.msra.mxu0 0
  %296 = vmatprep.subr.bf16.mxu0 0
  %297 = vmatpush1.bf16.msra.mxu0 0
  %298 = vmatprep.subr.bf16.mxu0 0
  %299 = vmatpush1.bf16.msra.mxu0 0
  %300 = vmatprep.subr.bf16.mxu0 0
  %301 = vmatpush1.bf16.msra.mxu0 0
  %302 = vmatprep.subr.bf16.mxu0 0
  %303 = vmatpush1.bf16.msra.mxu0 0
  %304 = vmatprep.mubr.bf16.mxu0 0
  %305 = vmatmul.mubr.bf16.gmra.mrb[0].mxu0 %v192
  %v306 = vpop.f32.mrb[0].mxu0
  %v307 = vadd.f32 0.0, %v306
  %v308 = vpop.f32.mrb[0].mxu0
  %v309 = vpop.f32.mrb[0].mxu0
  %v310 = vadd.f32 0.0, %v309
  %v311 = vpop.f32.mrb[0].mxu0
  %312 = vmatprep.mubr.bf16.mxu0 0
  %313 = vmatmul.mubr.bf16.gmra.mrb[0].mxu0 %v193
  %v314 = vpop.f32.mrb[0].mxu0
  %v315 = vadd.f32 0.0, %v314
  %v316 = vpop.f32.mrb[0].mxu0
  %v317 = vpop.f32.mrb[0].mxu0
  %v318 = vadd.f32 0.0, %v317
  %v319 = vpop.f32.mrb[0].mxu0
  %320 = vmatprep.mubr.bf16.mxu0 0
  %321 = vmatmul.mubr.bf16.gmra.mrb[0].mxu0 %v194
  %v322 = vpop.f32.mrb[0].mxu0
  %v323 = vadd.f32 0.0, %v322
  %v324 = vpop.f32.mrb[0].mxu0
  %v325 = vpop.f32.mrb[0].mxu0
  %v326 = vadd.f32 0.0, %v325
  %v327 = vpop.f32.mrb[0].mxu0
  %328 = vmatprep.mubr.bf16.mxu0 0
  %329 = vmatmul.mubr.bf16.gmra.mrb[0].mxu0 %v195
  %v330 = vpop.f32.mrb[0].mxu0
  %v331 = vadd.f32 0.0, %v330
  %v332 = vpop.f32.mrb[0].mxu0
  %v333 = vpop.f32.mrb[0].mxu0
  %v334 = vadd.f32 0.0, %v333
  %v335 = vpop.f32.mrb[0].mxu0
  %336 = vmatprep.mubr.bf16.mxu0 0
  %337 = vmatmul.mubr.bf16.gmra.mrb[0].mxu0 %v196
  %v338 = vpop.f32.mrb[0].mxu0
  %v339 = vadd.f32 0.0, %v338
  %v340 = vpop.f32.mrb[0].mxu0
  %v341 = vpop.f32.mrb[0].mxu0
  %v342 = vadd.f32 0.0, %v341
  %v343 = vpop.f32.mrb[0].mxu0
  %344 = vmatprep.mubr.bf16.mxu0 0
  %345 = vmatmul.mubr.bf16.gmra.mrb[0].mxu0 %v197
  %v346 = vpop.f32.mrb[0].mxu0
  %v347 = vadd.f32 0.0, %v346
  %v348 = vpop.f32.mrb[0].mxu0
  %v349 = vpop.f32.mrb[0].mxu0
  %v350 = vadd.f32 0.0, %v349
  %v351 = vpop.f32.mrb[0].mxu0
  %352 = vmatprep.mubr.bf16.mxu0 0
  %353 = vmatmul.mubr.bf16.gmra.mrb[0].mxu0 %v198
  %v354 = vpop.f32.mrb[0].mxu0
  %v355 = vadd.f32 0.0, %v354
  %v356 = vpop.f32.mrb[0].mxu0
  %v357 = vpop.f32.mrb[0].mxu0
  %v358 = vadd.f32 0.0, %v357
  %v359 = vpop.f32.mrb[0].mxu0
  %360 = vmatprep.mubr.bf16.mxu0 0
  %361 = vmatmul.mubr.bf16.gmra.mrb[0].mxu0 %v199
  %v362 = vpop.f32.mrb[0].mxu0
  %v363 = vadd.f32 0.0, %v362
  %v364 = vpop.f32.mrb[0].mxu0
  %v365 = vpop.f32.mrb[0].mxu0
  %v366 = vadd.f32 0.0, %v365
  %v367 = vpop.f32.mrb[0].mxu0
  %368 = vmatprep.mubr.bf16.mxu0 0
  %369 = vmatmul.mubr.bf16.gmra.mrb[0].mxu0 %v200
  %v370 = vpop.f32.mrb[0].mxu0
  %v371 = vadd.f32 0.0, %v370
  %v372 = vpop.f32.mrb[0].mxu0
  %v373 = vpop.f32.mrb[0].mxu0
  %v374 = vadd.f32 0.0, %v373
  %v375 = vpop.f32.mrb[0].mxu0
  %376 = vmatprep.mubr.bf16.mxu0 0
  %377 = vmatmul.mubr.bf16.gmra.mrb[0].mxu0 %v201
  %v378 = vpop.f32.mrb[0].mxu0
  %v379 = vadd.f32 0.0, %v378
  %v380 = vpop.f32.mrb[0].mxu0
  %v381 = vpop.f32.mrb[0].mxu0
  %v382 = vadd.f32 0.0, %v381
  %v383 = vpop.f32.mrb[0].mxu0
  %384 = vmatprep.mubr.bf16.mxu0 0
  %385 = vmatmul.mubr.bf16.gmra.mrb[0].mxu0 %v202
  %v386 = vpop.f32.mrb[0].mxu0
  %v387 = vadd.f32 0.0, %v386
  %v388 = vpop.f32.mrb[0].mxu0
  %v389 = vpop.f32.mrb[0].mxu0
  %v390 = vadd.f32 0.0, %v389
  %v391 = vpop.f32.mrb[0].mxu0
  %392 = vmatprep.mubr.bf16.mxu0 0
  %393 = vmatmul.mubr.bf16.gmra.mrb[0].mxu0 %v203
  %v394 = vpop.f32.mrb[0].mxu0
  %v395 = vadd.f32 0.0, %v394
  %v396 = vpop.f32.mrb[0].mxu0
  %v397 = vpop.f32.mrb[0].mxu0
  %v398 = vadd.f32 0.0, %v397
  %v399 = vpop.f32.mrb[0].mxu0
  %400 = vmatprep.mubr.bf16.mxu0 0
  %401 = vmatmul.mubr.bf16.gmra.mrb[0].mxu0 %v204
  %v402 = vpop.f32.mrb[0].mxu0
  %v403 = vadd.f32 0.0, %v402
  %v404 = vpop.f32.mrb[0].mxu0
  %v405 = vpop.f32.mrb[0].mxu0
  %v406 = vadd.f32 0.0, %v405
  %v407 = vpop.f32.mrb[0].mxu0
  %408 = vmatprep.mubr.bf16.mxu0 0
  %409 = vmatmul.mubr.bf16.gmra.mrb[0].mxu0 %v205
  %v410 = vpop.f32.mrb[0].mxu0
  %v411 = vadd.f32 0.0, %v410
  %v412 = vpop.f32.mrb[0].mxu0
  %v413 = vpop.f32.mrb[0].mxu0
  %v414 = vadd.f32 0.0, %v413
  %v415 = vpop.f32.mrb[0].mxu0
  %416 = vmatprep.mubr.bf16.mxu0 0
  %417 = vmatmul.mubr.bf16.gmra.mrb[0].mxu0 %v206
  %v418 = vpop.f32.mrb[0].mxu0
  %v419 = vadd.f32 0.0, %v418
  %v420 = vpop.f32.mrb[0].mxu0
  %v421 = vpop.f32.mrb[0].mxu0
  %v422 = vadd.f32 0.0, %v421
  %v423 = vpop.f32.mrb[0].mxu0
  %424 = vmatprep.mubr.bf16.mxu0 0
  %425 = vmatmul.mubr.bf16.gmra.mrb[0].mxu0 %v207
  %v426 = vpop.f32.mrb[0].mxu0
  %v427 = vadd.f32 0.0, %v426
  %v428 = vpop.f32.mrb[0].mxu0
  %v429 = vpop.f32.mrb[0].mxu0
  %v430 = vadd.f32 0.0, %v429
  %v431 = vpop.f32.mrb[0].mxu0
  %432 = vdwg.mxu0
  %v433 = vadd.f32 %v48, %v307
  %v434 = vadd.f32 %v49, %v310
  %v435 = vadd.f32 %v50, %v315
  %v436 = vadd.f32 %v51, %v318
  %v437 = vadd.f32 %v52, %v323
  %v438 = vadd.f32 %v53, %v326
  %v439 = vadd.f32 %v54, %v331
  %v440 = vadd.f32 %v55, %v334
  %v441 = vadd.f32 %v56, %v339
  %v442 = vadd.f32 %v57, %v342
  %v443 = vadd.f32 %v58, %v347
  %v444 = vadd.f32 %v59, %v350
  %v445 = vadd.f32 %v60, %v355
  %v446 = vadd.f32 %v61, %v358
  %v447 = vadd.f32 %v62, %v363
  %v448 = vadd.f32 %v63, %v366
  %v449 = vadd.f32 %v64, %v371
  %v450 = vadd.f32 %v65, %v374
  %v451 = vadd.f32 %v66, %v379
  %v452 = vadd.f32 %v67, %v382
  %v453 = vadd.f32 %v68, %v387
  %v454 = vadd.f32 %v69, %v390
  %v455 = vadd.f32 %v70, %v395
  %v456 = vadd.f32 %v71, %v398
  %v457 = vadd.f32 %v72, %v403
  %v458 = vadd.f32 %v73, %v406
  %v459 = vadd.f32 %v74, %v411
  %v460 = vadd.f32 %v75, %v414
  %v461 = vadd.f32 %v76, %v419
  %v462 = vadd.f32 %v77, %v422
  %v463 = vadd.f32 %v78, %v427
  %v464 = vadd.f32 %v79, %v430
  %465 = vst [vmem:[#allocation2] sm:$0xff] %v433
  %466 = vst [vmem:[#allocation2 + $0x8] sm:$0xff] %v434
  %467 = vst [vmem:[#allocation2 + $0x10] sm:$0xff] %v435
  %468 = vst [vmem:[#allocation2 + $0x18] sm:$0xff] %v436
  %469 = vst [vmem:[#allocation2 + $0x20] sm:$0xff] %v437
  %470 = vst [vmem:[#allocation2 + $0x28] sm:$0xff] %v438
  %471 = vst [vmem:[#allocation2 + $0x30] sm:$0xff] %v439
  %472 = vst [vmem:[#allocation2 + $0x38] sm:$0xff] %v440
  %473 = vst [vmem:[#allocation2 + $0x40] sm:$0xff] %v441
  %474 = vst [vmem:[#allocation2 + $0x48] sm:$0xff] %v442
  %475 = vst [vmem:[#allocation2 + $0x50] sm:$0xff] %v443
  %476 = vst [vmem:[#allocation2 + $0x58] sm:$0xff] %v444
  %477 = vst [vmem:[#allocation2 + $0x60] sm:$0xff] %v445
  %478 = vst [vmem:[#allocation2 + $0x68] sm:$0xff] %v446
  %479 = vst [vmem:[#allocation2 + $0x70] sm:$0xff] %v447
  %480 = vst [vmem:[#allocation2 + $0x78] sm:$0xff] %v448
  %481 = vst [vmem:[#allocation2 + $0x80] sm:$0xff] %v449
  %482 = vst [vmem:[#allocation2 + $0x88] sm:$0xff] %v450
  %483 = vst [vmem:[#allocation2 + $0x90] sm:$0xff] %v451
  %484 = vst [vmem:[#allocation2 + $0x98] sm:$0xff] %v452
  %485 = vst [vmem:[#allocation2 + $0xa0] sm:$0xff] %v453
  %486 = vst [vmem:[#allocation2 + $0xa8] sm:$0xff] %v454
  %487 = vst [vmem:[#allocation2 + $0xb0] sm:$0xff] %v455
  %488 = vst [vmem:[#allocation2 + $0xb8] sm:$0xff] %v456
  %489 = vst [vmem:[#allocation2 + $0xc0] sm:$0xff] %v457
  %490 = vst [vmem:[#allocation2 + $0xc8] sm:$0xff] %v458
  %491 = vst [vmem:[#allocation2 + $0xd0] sm:$0xff] %v459
  %492 = vst [vmem:[#allocation2 + $0xd8] sm:$0xff] %v460
  %493 = vst [vmem:[#allocation2 + $0xe0] sm:$0xff] %v461
  %494 = vst [vmem:[#allocation2 + $0xe8] sm:$0xff] %v462
  %495 = vst [vmem:[#allocation2 + $0xf0] sm:$0xff] %v463
  %496 = vst [vmem:[#allocation2 + $0xf8] sm:$0xff] %v464
  // Predicated region
  $region14: #{gcn_forward.6} parent=0 // pred_check
    %p497 = pneg %p12
  $region15: #{gcn_forward.6} parent=0 // pred_check_branch
    %499 = sbr.rel (%p497) target = $region17
  $region16: #{gcn_forward.6} parent=0 // pred_region
    %v500 = vld [vmem:[#allocation2] sm:$0xff]
    %v501 = vld [vmem:[#allocation2 + $0x8] sm:$0xff]
    %v502 = vld [vmem:[#allocation2 + $0x10] sm:$0xff]
    %v503 = vld [vmem:[#allocation2 + $0x18] sm:$0xff]
    %v504 = vld [vmem:[#allocation2 + $0x20] sm:$0xff]
    %v505 = vld [vmem:[#allocation2 + $0x28] sm:$0xff]
    %v506 = vld [vmem:[#allocation2 + $0x30] sm:$0xff]
    %v507 = vld [vmem:[#allocation2 + $0x38] sm:$0xff]
    %v508 = vld [vmem:[#allocation2 + $0x40] sm:$0xff]
    %v509 = vld [vmem:[#allocation2 + $0x48] sm:$0xff]
    %v510 = vld [vmem:[#allocation2 + $0x50] sm:$0xff]
    %v511 = vld [vmem:[#allocation2 + $0x58] sm:$0xff]
    %v512 = vld [vmem:[#allocation2 + $0x60] sm:$0xff]
    %v513 = vld [vmem:[#allocation2 + $0x68] sm:$0xff]
    %v514 = vld [vmem:[#allocation2 + $0x70] sm:$0xff]
    %v515 = vld [vmem:[#allocation2 + $0x78] sm:$0xff]
    %v516 = vld [vmem:[#allocation2 + $0x80] sm:$0xff]
    %v517 = vld [vmem:[#allocation2 + $0x88] sm:$0xff]
    %v518 = vld [vmem:[#allocation2 + $0x90] sm:$0xff]
    %v519 = vld [vmem:[#allocation2 + $0x98] sm:$0xff]
    %v520 = vld [vmem:[#allocation2 + $0xa0] sm:$0xff]
    %v521 = vld [vmem:[#allocation2 + $0xa8] sm:$0xff]
    %v522 = vld [vmem:[#allocation2 + $0xb0] sm:$0xff]
    %v523 = vld [vmem:[#allocation2 + $0xb8] sm:$0xff]
    %v524 = vld [vmem:[#allocation2 + $0xc0] sm:$0xff]
    %v525 = vld [vmem:[#allocation2 + $0xc8] sm:$0xff]
    %v526 = vld [vmem:[#allocation2 + $0xd0] sm:$0xff]
    %v527 = vld [vmem:[#allocation2 + $0xd8] sm:$0xff]
    %v528 = vld [vmem:[#allocation2 + $0xe0] sm:$0xff]
    %v529 = vld [vmem:[#allocation2 + $0xe8] sm:$0xff]
    %v530 = vld [vmem:[#allocation2 + $0xf0] sm:$0xff]
    %v531 = vld [vmem:[#allocation2 + $0xf8] sm:$0xff]
    %v532 = vpack.c.bf16 %v501, %v500
    %v533 = vpack.c.bf16 %v503, %v502
    %v534 = vpack.c.bf16 %v505, %v504
    %v535 = vpack.c.bf16 %v507, %v506
    %v536 = vpack.c.bf16 %v509, %v508
    %v537 = vpack.c.bf16 %v511, %v510
    %v538 = vpack.c.bf16 %v513, %v512
    %v539 = vpack.c.bf16 %v515, %v514
    %v540 = vpack.c.bf16 %v517, %v516
    %v541 = vpack.c.bf16 %v519, %v518
    %v542 = vpack.c.bf16 %v521, %v520
    %v543 = vpack.c.bf16 %v523, %v522
    %v544 = vpack.c.bf16 %v525, %v524
    %v545 = vpack.c.bf16 %v527, %v526
    %v546 = vpack.c.bf16 %v529, %v528
    %v547 = vpack.c.bf16 %v531, %v530
    %v564 = vunpack.c.l.b16 %v532
    %v565 = vunpack.c.h.b16 %v532
    %v566 = vunpack.c.l.b16 %v533
    %v567 = vunpack.c.h.b16 %v533
    %v568 = vunpack.c.l.b16 %v534
    %v569 = vunpack.c.h.b16 %v534
    %v570 = vunpack.c.l.b16 %v535
    %v571 = vunpack.c.h.b16 %v535
    %v572 = vunpack.c.l.b16 %v536
    %v573 = vunpack.c.h.b16 %v536
    %v574 = vunpack.c.l.b16 %v537
    %v575 = vunpack.c.h.b16 %v537
    %v576 = vunpack.c.l.b16 %v538
    %v577 = vunpack.c.h.b16 %v538
    %v578 = vunpack.c.l.b16 %v539
    %v579 = vunpack.c.h.b16 %v539
    %v580 = vunpack.c.l.b16 %v540
    %v581 = vunpack.c.h.b16 %v540
    %v582 = vunpack.c.l.b16 %v541
    %v583 = vunpack.c.h.b16 %v541
    %v584 = vunpack.c.l.b16 %v542
    %v585 = vunpack.c.h.b16 %v542
    %v586 = vunpack.c.l.b16 %v543
    %v587 = vunpack.c.h.b16 %v543
    %v588 = vunpack.c.l.b16 %v544
    %v589 = vunpack.c.h.b16 %v544
    %v590 = vunpack.c.l.b16 %v545
    %v591 = vunpack.c.h.b16 %v545
    %v592 = vunpack.c.l.b16 %v546
    %v593 = vunpack.c.h.b16 %v546
    %v594 = vunpack.c.l.b16 %v547
    %v595 = vunpack.c.h.b16 %v547
    %v596 = vpack.c.b16 %v564, %v564
    %v597 = vpack.c.b16 %v565, %v565
    %v598 = vpack.c.b16 %v566, %v566
    %v599 = vpack.c.b16 %v567, %v567
    %v600 = vpack.c.b16 %v568, %v568
    %v601 = vpack.c.b16 %v569, %v569
    %v602 = vpack.c.b16 %v570, %v570
    %v603 = vpack.c.b16 %v571, %v571
    %v604 = vpack.c.b16 %v572, %v572
    %v605 = vpack.c.b16 %v573, %v573
    %v606 = vpack.c.b16 %v574, %v574
    %v607 = vpack.c.b16 %v575, %v575
    %v608 = vpack.c.b16 %v576, %v576
    %v609 = vpack.c.b16 %v577, %v577
    %v610 = vpack.c.b16 %v578, %v578
    %v611 = vpack.c.b16 %v579, %v579
    %v612 = vpack.c.b16 %v580, %v580
    %v613 = vpack.c.b16 %v581, %v581
    %v614 = vpack.c.b16 %v582, %v582
    %v615 = vpack.c.b16 %v583, %v583
    %v616 = vpack.c.b16 %v584, %v584
    %v617 = vpack.c.b16 %v585, %v585
    %v618 = vpack.c.b16 %v586, %v586
    %v619 = vpack.c.b16 %v587, %v587
    %v620 = vpack.c.b16 %v588, %v588
    %v621 = vpack.c.b16 %v589, %v589
    %v622 = vpack.c.b16 %v590, %v590
    %v623 = vpack.c.b16 %v591, %v591
    %v624 = vpack.c.b16 %v592, %v592
    %v625 = vpack.c.b16 %v593, %v593
    %v626 = vpack.c.b16 %v594, %v594
    %v627 = vpack.c.b16 %v595, %v595
    %660 = vst [vmem:[%s2] sm:$0xf] %v596
    %661 = vst [vmem:[%s2 + $0x4] sm:$0xf] %v597
    %662 = vst [vmem:[%s2 + $0x8] sm:$0xf] %v598
    %663 = vst [vmem:[%s2 + $0xc] sm:$0xf] %v599
    %664 = vst [vmem:[%s2 + $0x10] sm:$0xf] %v600
    %665 = vst [vmem:[%s2 + $0x14] sm:$0xf] %v601
    %666 = vst [vmem:[%s2 + $0x18] sm:$0xf] %v602
    %667 = vst [vmem:[%s2 + $0x1c] sm:$0xf] %v603
    %668 = vst [vmem:[%s2 + $0x20] sm:$0xf] %v604
    %669 = vst [vmem:[%s2 + $0x24] sm:$0xf] %v605
    %670 = vst [vmem:[%s2 + $0x28] sm:$0xf] %v606
    %671 = vst [vmem:[%s2 + $0x2c] sm:$0xf] %v607
    %672 = vst [vmem:[%s2 + $0x30] sm:$0xf] %v608
    %673 = vst [vmem:[%s2 + $0x34] sm:$0xf] %v609
    %674 = vst [vmem:[%s2 + $0x38] sm:$0xf] %v610
    %675 = vst [vmem:[%s2 + $0x3c] sm:$0xf] %v611
    %676 = vst [vmem:[%s2 + $0x40] sm:$0xf] %v612
    %677 = vst [vmem:[%s2 + $0x44] sm:$0xf] %v613
    %678 = vst [vmem:[%s2 + $0x48] sm:$0xf] %v614
    %679 = vst [vmem:[%s2 + $0x4c] sm:$0xf] %v615
    %680 = vst [vmem:[%s2 + $0x50] sm:$0xf] %v616
    %681 = vst [vmem:[%s2 + $0x54] sm:$0xf] %v617
    %682 = vst [vmem:[%s2 + $0x58] sm:$0xf] %v618
    %683 = vst [vmem:[%s2 + $0x5c] sm:$0xf] %v619
    %684 = vst [vmem:[%s2 + $0x60] sm:$0xf] %v620
    %685 = vst [vmem:[%s2 + $0x64] sm:$0xf] %v621
    %686 = vst [vmem:[%s2 + $0x68] sm:$0xf] %v622
    %687 = vst [vmem:[%s2 + $0x6c] sm:$0xf] %v623
    %688 = vst [vmem:[%s2 + $0x70] sm:$0xf] %v624
    %689 = vst [vmem:[%s2 + $0x74] sm:$0xf] %v625
    %690 = vst [vmem:[%s2 + $0x78] sm:$0xf] %v626
    %691 = vst [vmem:[%s2 + $0x7c] sm:$0xf] %v627
  $region17: #{gcn_forward.6} parent=0 // pred_fallthru
    _
  // Predicated region
  $region18: #{gcn_forward.6} parent=0 // pred_check
    _
  $region19: #{gcn_forward.6} parent=0 // pred_check_branch
    %693 = sbr.rel (0) target = $region21
  $region20: #{gcn_forward.6} parent=0 // pred_region
    _
  $region21: #{gcn_forward.6} parent=0 // pred_fallthru
    _
  // Predicated region
  $region22: #{gcn_forward.6} parent=0 // pred_check
    _
  $region23: #{gcn_forward.6} parent=0 // pred_check_branch
    %695 = sbr.rel (0) target = $region25
  $region24: #{gcn_forward.6} parent=0 // pred_region
    _
  $region25: #{gcn_forward.6} parent=0 // pred_fallthru
    _

// kernel: gcn_forward.11
$region0: #{gcn_forward.11}
  #allocation0 [shape = 'u32[]', space=smem, size = 0x4, offset = 0x4, fixed_abs, tag = 'smem constant byte address 0x4 - core index']
  #allocation1 [shape = 'u32[144,128]{1,0:T(1,128)}', space=vmem, size = 0x12000, scoped, tag = 'internal scratch']
  #allocation2 [shape = 'f32[256,128]{1,0:T(8,128)}', space=vmem, size = 0x20000, scoped, tag = 'scratch operand']
  %s0 = inlined_call_operand.vmem [shape: bf16[256,256], index: 0, kind: input, shape index: {}]
  %s1 = inlined_call_operand.vmem [shape: bf16[256,128], index: 1, kind: input, shape index: {}]
  %s2 = inlined_call_operand.vmem [shape: f32[1,128], index: 2, kind: input, shape index: {}]
  %s3 = inlined_call_operand.vmem [shape: f32[256,128], index: 3, kind: output, shape index: {}]
  %s4 = sld [smem:[#allocation0]]
  $region30: #{gcn_forward.11} parent=0
    _
  %s6 = ssub.s32 1, %s4
  %s7 = scalar_select 0, %s6, %s4
  // Predicated region
  $region2: #{gcn_forward.11} parent=0 // pred_check
    _
  $region3: #{gcn_forward.11} parent=0 // pred_check_branch
    %9 = sbr.rel (0) target = $region5
  $region4: #{gcn_forward.11} parent=0 // pred_region
    _
  $region5: #{gcn_forward.11} parent=0 // pred_fallthru
    _
  // Predicated region
  $region6: #{gcn_forward.11} parent=0 // pred_check
    _
  $region7: #{gcn_forward.11} parent=0 // pred_check_branch
    %11 = sbr.rel (0) target = $region9
  $region8: #{gcn_forward.11} parent=0 // pred_region
    _
  $region9: #{gcn_forward.11} parent=0 // pred_fallthru
    _
  // Predicated region
  $region10: #{gcn_forward.11} parent=0 // pred_check
    _
  $region11: #{gcn_forward.11} parent=0 // pred_check_branch
    %13 = sbr.rel (0) target = $region13
  $region12: #{gcn_forward.11} parent=0 // pred_region
    _
  $region13: #{gcn_forward.11} parent=0 // pred_fallthru
    _
  %p15 = scmp.eq.s32.totalorder 0, 0
  // Predicated region
  $region14: #{gcn_forward.11} parent=0 // pred_check
    %p16 = pneg %p15
  $region15: #{gcn_forward.11} parent=0 // pred_check_branch
    %18 = sbr.rel (%p16) target = $region17
  $region16: #{gcn_forward.11} parent=0 // pred_region
    %19 = vst [vmem:[#allocation2] sm:$0xff] 0.0
    %20 = vst [vmem:[#allocation2 + $0x8] sm:$0xff] 0.0
    %21 = vst [vmem:[#allocation2 + $0x10] sm:$0xff] 0.0
    %22 = vst [vmem:[#allocation2 + $0x18] sm:$0xff] 0.0
    %23 = vst [vmem:[#allocation2 + $0x20] sm:$0xff] 0.0
    %24 = vst [vmem:[#allocation2 + $0x28] sm:$0xff] 0.0
    %25 = vst [vmem:[#allocation2 + $0x30] sm:$0xff] 0.0
    %26 = vst [vmem:[#allocation2 + $0x38] sm:$0xff] 0.0
    %27 = vst [vmem:[#allocation2 + $0x40] sm:$0xff] 0.0
    %28 = vst [vmem:[#allocation2 + $0x48] sm:$0xff] 0.0
    %29 = vst [vmem:[#allocation2 + $0x50] sm:$0xff] 0.0
    %30 = vst [vmem:[#allocation2 + $0x58] sm:$0xff] 0.0
    %31 = vst [vmem:[#allocation2 + $0x60] sm:$0xff] 0.0
    %32 = vst [vmem:[#allocation2 + $0x68] sm:$0xff] 0.0
    %33 = vst [vmem:[#allocation2 + $0x70] sm:$0xff] 0.0
    %34 = vst [vmem:[#allocation2 + $0x78] sm:$0xff] 0.0
    %35 = vst [vmem:[#allocation2 + $0x80] sm:$0xff] 0.0
    %36 = vst [vmem:[#allocation2 + $0x88] sm:$0xff] 0.0
    %37 = vst [vmem:[#allocation2 + $0x90] sm:$0xff] 0.0
    %38 = vst [vmem:[#allocation2 + $0x98] sm:$0xff] 0.0
    %39 = vst [vmem:[#allocation2 + $0xa0] sm:$0xff] 0.0
    %40 = vst [vmem:[#allocation2 + $0xa8] sm:$0xff] 0.0
    %41 = vst [vmem:[#allocation2 + $0xb0] sm:$0xff] 0.0
    %42 = vst [vmem:[#allocation2 + $0xb8] sm:$0xff] 0.0
    %43 = vst [vmem:[#allocation2 + $0xc0] sm:$0xff] 0.0
    %44 = vst [vmem:[#allocation2 + $0xc8] sm:$0xff] 0.0
    %45 = vst [vmem:[#allocation2 + $0xd0] sm:$0xff] 0.0
    %46 = vst [vmem:[#allocation2 + $0xd8] sm:$0xff] 0.0
    %47 = vst [vmem:[#allocation2 + $0xe0] sm:$0xff] 0.0
    %48 = vst [vmem:[#allocation2 + $0xe8] sm:$0xff] 0.0
    %49 = vst [vmem:[#allocation2 + $0xf0] sm:$0xff] 0.0
    %50 = vst [vmem:[#allocation2 + $0xf8] sm:$0xff] 0.0
  $region17: #{gcn_forward.11} parent=0 // pred_fallthru
    _
  %v51 = vld [vmem:[#allocation2] sm:$0xff]
  %v52 = vld [vmem:[#allocation2 + $0x8] sm:$0xff]
  %v53 = vld [vmem:[#allocation2 + $0x10] sm:$0xff]
  %v54 = vld [vmem:[#allocation2 + $0x18] sm:$0xff]
  %v55 = vld [vmem:[#allocation2 + $0x20] sm:$0xff]
  %v56 = vld [vmem:[#allocation2 + $0x28] sm:$0xff]
  %v57 = vld [vmem:[#allocation2 + $0x30] sm:$0xff]
  %v58 = vld [vmem:[#allocation2 + $0x38] sm:$0xff]
  %v59 = vld [vmem:[#allocation2 + $0x40] sm:$0xff]
  %v60 = vld [vmem:[#allocation2 + $0x48] sm:$0xff]
  %v61 = vld [vmem:[#allocation2 + $0x50] sm:$0xff]
  %v62 = vld [vmem:[#allocation2 + $0x58] sm:$0xff]
  %v63 = vld [vmem:[#allocation2 + $0x60] sm:$0xff]
  %v64 = vld [vmem:[#allocation2 + $0x68] sm:$0xff]
  %v65 = vld [vmem:[#allocation2 + $0x70] sm:$0xff]
  %v66 = vld [vmem:[#allocation2 + $0x78] sm:$0xff]
  %v67 = vld [vmem:[#allocation2 + $0x80] sm:$0xff]
  %v68 = vld [vmem:[#allocation2 + $0x88] sm:$0xff]
  %v69 = vld [vmem:[#allocation2 + $0x90] sm:$0xff]
  %v70 = vld [vmem:[#allocation2 + $0x98] sm:$0xff]
  %v71 = vld [vmem:[#allocation2 + $0xa0] sm:$0xff]
  %v72 = vld [vmem:[#allocation2 + $0xa8] sm:$0xff]
  %v73 = vld [vmem:[#allocation2 + $0xb0] sm:$0xff]
  %v74 = vld [vmem:[#allocation2 + $0xb8] sm:$0xff]
  %v75 = vld [vmem:[#allocation2 + $0xc0] sm:$0xff]
  %v76 = vld [vmem:[#allocation2 + $0xc8] sm:$0xff]
  %v77 = vld [vmem:[#allocation2 + $0xd0] sm:$0xff]
  %v78 = vld [vmem:[#allocation2 + $0xd8] sm:$0xff]
  %v79 = vld [vmem:[#allocation2 + $0xe0] sm:$0xff]
  %v80 = vld [vmem:[#allocation2 + $0xe8] sm:$0xff]
  %v81 = vld [vmem:[#allocation2 + $0xf0] sm:$0xff]
  %v82 = vld [vmem:[#allocation2 + $0xf8] sm:$0xff]
  %v83 = vld [vmem:[%s0] sm:$0xff]
  %v84 = vld [vmem:[%s0 + $0x8] sm:$0xff]
  %v85 = vld [vmem:[%s0 + $0x10] sm:$0xff]
  %v86 = vld [vmem:[%s0 + $0x18] sm:$0xff]
  %v87 = vld [vmem:[%s0 + $0x20] sm:$0xff]
  %v88 = vld [vmem:[%s0 + $0x28] sm:$0xff]
  %v89 = vld [vmem:[%s0 + $0x30] sm:$0xff]
  %v90 = vld [vmem:[%s0 + $0x38] sm:$0xff]
  %v91 = vld [vmem:[%s0 + $0x40] sm:$0xff]
  %v92 = vld [vmem:[%s0 + $0x48] sm:$0xff]
  %v93 = vld [vmem:[%s0 + $0x50] sm:$0xff]
  %v94 = vld [vmem:[%s0 + $0x58] sm:$0xff]
  %v95 = vld [vmem:[%s0 + $0x60] sm:$0xff]
  %v96 = vld [vmem:[%s0 + $0x68] sm:$0xff]
  %v97 = vld [vmem:[%s0 + $0x70] sm:$0xff]
  %v98 = vld [vmem:[%s0 + $0x78] sm:$0xff]
  %v99 = vld [vmem:[%s0 + $0x80] sm:$0xff]
  %v100 = vld [vmem:[%s0 + $0x88] sm:$0xff]
  %v101 = vld [vmem:[%s0 + $0x90] sm:$0xff]
  %v102 = vld [vmem:[%s0 + $0x98] sm:$0xff]
  %v103 = vld [vmem:[%s0 + $0xa0] sm:$0xff]
  %v104 = vld [vmem:[%s0 + $0xa8] sm:$0xff]
  %v105 = vld [vmem:[%s0 + $0xb0] sm:$0xff]
  %v106 = vld [vmem:[%s0 + $0xb8] sm:$0xff]
  %v107 = vld [vmem:[%s0 + $0xc0] sm:$0xff]
  %v108 = vld [vmem:[%s0 + $0xc8] sm:$0xff]
  %v109 = vld [vmem:[%s0 + $0xd0] sm:$0xff]
  %v110 = vld [vmem:[%s0 + $0xd8] sm:$0xff]
  %v111 = vld [vmem:[%s0 + $0xe0] sm:$0xff]
  %v112 = vld [vmem:[%s0 + $0xe8] sm:$0xff]
  %v113 = vld [vmem:[%s0 + $0xf0] sm:$0xff]
  %v114 = vld [vmem:[%s0 + $0xf8] sm:$0xff]
  %v115 = vld [vmem:[%s1] sm:$0xf]
  %v116 = vld [vmem:[%s1 + $0x4] sm:$0xf]
  %v117 = vld [vmem:[%s1 + $0x8] sm:$0xf]
  %v118 = vld [vmem:[%s1 + $0xc] sm:$0xf]
  %v119 = vld [vmem:[%s1 + $0x10] sm:$0xf]
  %v120 = vld [vmem:[%s1 + $0x14] sm:$0xf]
  %v121 = vld [vmem:[%s1 + $0x18] sm:$0xf]
  %v122 = vld [vmem:[%s1 + $0x1c] sm:$0xf]
  %v123 = vld [vmem:[%s1 + $0x20] sm:$0xf]
  %v124 = vld [vmem:[%s1 + $0x24] sm:$0xf]
  %v125 = vld [vmem:[%s1 + $0x28] sm:$0xf]
  %v126 = vld [vmem:[%s1 + $0x2c] sm:$0xf]
  %v127 = vld [vmem:[%s1 + $0x30] sm:$0xf]
  %v128 = vld [vmem:[%s1 + $0x34] sm:$0xf]
  %v129 = vld [vmem:[%s1 + $0x38] sm:$0xf]
  %v130 = vld [vmem:[%s1 + $0x3c] sm:$0xf]
  %v131 = vld [vmem:[%s1 + $0x40] sm:$0xf]
  %v132 = vld [vmem:[%s1 + $0x44] sm:$0xf]
  %v133 = vld [vmem:[%s1 + $0x48] sm:$0xf]
  %v134 = vld [vmem:[%s1 + $0x4c] sm:$0xf]
  %v135 = vld [vmem:[%s1 + $0x50] sm:$0xf]
  %v136 = vld [vmem:[%s1 + $0x54] sm:$0xf]
  %v137 = vld [vmem:[%s1 + $0x58] sm:$0xf]
  %v138 = vld [vmem:[%s1 + $0x5c] sm:$0xf]
  %v139 = vld [vmem:[%s1 + $0x60] sm:$0xf]
  %v140 = vld [vmem:[%s1 + $0x64] sm:$0xf]
  %v141 = vld [vmem:[%s1 + $0x68] sm:$0xf]
  %v142 = vld [vmem:[%s1 + $0x6c] sm:$0xf]
  %v143 = vld [vmem:[%s1 + $0x70] sm:$0xf]
  %v144 = vld [vmem:[%s1 + $0x74] sm:$0xf]
  %v145 = vld [vmem:[%s1 + $0x78] sm:$0xf]
  %v146 = vld [vmem:[%s1 + $0x7c] sm:$0xf]
  %v179 = vunpack.c.l.b16 %v83
  %v180 = vunpack.c.h.b16 %v83
  %v181 = vunpack.c.l.b16 %v84
  %v182 = vunpack.c.h.b16 %v84
  %v183 = vunpack.c.l.b16 %v85
  %v184 = vunpack.c.h.b16 %v85
  %v185 = vunpack.c.l.b16 %v86
  %v186 = vunpack.c.h.b16 %v86
  %v187 = vunpack.c.l.b16 %v87
  %v188 = vunpack.c.h.b16 %v87
  %v189 = vunpack.c.l.b16 %v88
  %v190 = vunpack.c.h.b16 %v88
  %v191 = vunpack.c.l.b16 %v89
  %v192 = vunpack.c.h.b16 %v89
  %v193 = vunpack.c.l.b16 %v90
  %v194 = vunpack.c.h.b16 %v90
  %v195 = vunpack.c.l.b16 %v91
  %v196 = vunpack.c.h.b16 %v91
  %v197 = vunpack.c.l.b16 %v92
  %v198 = vunpack.c.h.b16 %v92
  %v199 = vunpack.c.l.b16 %v93
  %v200 = vunpack.c.h.b16 %v93
  %v201 = vunpack.c.l.b16 %v94
  %v202 = vunpack.c.h.b16 %v94
  %v203 = vunpack.c.l.b16 %v95
  %v204 = vunpack.c.h.b16 %v95
  %v205 = vunpack.c.l.b16 %v96
  %v206 = vunpack.c.h.b16 %v96
  %v207 = vunpack.c.l.b16 %v97
  %v208 = vunpack.c.h.b16 %v97
  %v209 = vunpack.c.l.b16 %v98
  %v210 = vunpack.c.h.b16 %v98
  %v211 = vunpack.c.l.b16 %v99
  %v212 = vunpack.c.h.b16 %v99
  %v213 = vunpack.c.l.b16 %v100
  %v214 = vunpack.c.h.b16 %v100
  %v215 = vunpack.c.l.b16 %v101
  %v216 = vunpack.c.h.b16 %v101
  %v217 = vunpack.c.l.b16 %v102
  %v218 = vunpack.c.h.b16 %v102
  %v219 = vunpack.c.l.b16 %v103
  %v220 = vunpack.c.h.b16 %v103
  %v221 = vunpack.c.l.b16 %v104
  %v222 = vunpack.c.h.b16 %v104
  %v223 = vunpack.c.l.b16 %v105
  %v224 = vunpack.c.h.b16 %v105
  %v225 = vunpack.c.l.b16 %v106
  %v226 = vunpack.c.h.b16 %v106
  %v227 = vunpack.c.l.b16 %v107
  %v228 = vunpack.c.h.b16 %v107
  %v229 = vunpack.c.l.b16 %v108
  %v230 = vunpack.c.h.b16 %v108
  %v231 = vunpack.c.l.b16 %v109
  %v232 = vunpack.c.h.b16 %v109
  %v233 = vunpack.c.l.b16 %v110
  %v234 = vunpack.c.h.b16 %v110
  %v235 = vunpack.c.l.b16 %v111
  %v236 = vunpack.c.h.b16 %v111
  %v237 = vunpack.c.l.b16 %v112
  %v238 = vunpack.c.h.b16 %v112
  %v239 = vunpack.c.l.b16 %v113
  %v240 = vunpack.c.h.b16 %v113
  %v241 = vunpack.c.l.b16 %v114
  %v242 = vunpack.c.h.b16 %v114
  %v243 = vpack.c.b16 %v181, %v179
  %v244 = vpack.c.b16 %v182, %v180
  %v245 = vpack.c.b16 %v185, %v183
  %v246 = vpack.c.b16 %v186, %v184
  %v247 = vpack.c.b16 %v189, %v187
  %v248 = vpack.c.b16 %v190, %v188
  %v249 = vpack.c.b16 %v193, %v191
  %v250 = vpack.c.b16 %v194, %v192
  %v251 = vpack.c.b16 %v197, %v195
  %v252 = vpack.c.b16 %v198, %v196
  %v253 = vpack.c.b16 %v201, %v199
  %v254 = vpack.c.b16 %v202, %v200
  %v255 = vpack.c.b16 %v205, %v203
  %v256 = vpack.c.b16 %v206, %v204
  %v257 = vpack.c.b16 %v209, %v207
  %v258 = vpack.c.b16 %v210, %v208
  %v259 = vpack.c.b16 %v213, %v211
  %v260 = vpack.c.b16 %v214, %v212
  %v261 = vpack.c.b16 %v217, %v215
  %v262 = vpack.c.b16 %v218, %v216
  %v263 = vpack.c.b16 %v221, %v219
  %v264 = vpack.c.b16 %v222, %v220
  %v265 = vpack.c.b16 %v225, %v223
  %v266 = vpack.c.b16 %v226, %v224
  %v267 = vpack.c.b16 %v229, %v227
  %v268 = vpack.c.b16 %v230, %v228
  %v269 = vpack.c.b16 %v233, %v231
  %v270 = vpack.c.b16 %v234, %v232
  %v271 = vpack.c.b16 %v237, %v235
  %v272 = vpack.c.b16 %v238, %v236
  %v273 = vpack.c.b16 %v241, %v239
  %v274 = vpack.c.b16 %v242, %v240
  %v339 = vunpack.c.l.b16 %v115
  %v340 = vunpack.c.l.b16 %v116
  %v341 = vunpack.c.l.b16 %v117
  %v342 = vunpack.c.l.b16 %v118
  %v343 = vunpack.c.l.b16 %v119
  %v344 = vunpack.c.l.b16 %v120
  %v345 = vunpack.c.l.b16 %v121
  %v346 = vunpack.c.l.b16 %v122
  %v347 = vunpack.c.l.b16 %v123
  %v348 = vunpack.c.l.b16 %v124
  %v349 = vunpack.c.l.b16 %v125
  %v350 = vunpack.c.l.b16 %v126
  %v351 = vunpack.c.l.b16 %v127
  %v352 = vunpack.c.l.b16 %v128
  %v353 = vunpack.c.l.b16 %v129
  %v354 = vunpack.c.l.b16 %v130
  %v355 = vunpack.c.l.b16 %v131
  %v356 = vunpack.c.l.b16 %v132
  %v357 = vunpack.c.l.b16 %v133
  %v358 = vunpack.c.l.b16 %v134
  %v359 = vunpack.c.l.b16 %v135
  %v360 = vunpack.c.l.b16 %v136
  %v361 = vunpack.c.l.b16 %v137
  %v362 = vunpack.c.l.b16 %v138
  %v363 = vunpack.c.l.b16 %v139
  %v364 = vunpack.c.l.b16 %v140
  %v365 = vunpack.c.l.b16 %v141
  %v366 = vunpack.c.l.b16 %v142
  %v367 = vunpack.c.l.b16 %v143
  %v368 = vunpack.c.l.b16 %v144
  %v369 = vunpack.c.l.b16 %v145
  %v370 = vunpack.c.l.b16 %v146
  %v371 = vpack.c.b16 %v340, %v339
  %v372 = vpack.c.b16 %v342, %v341
  %v373 = vpack.c.b16 %v344, %v343
  %v374 = vpack.c.b16 %v346, %v345
  %v375 = vpack.c.b16 %v348, %v347
  %v376 = vpack.c.b16 %v350, %v349
  %v377 = vpack.c.b16 %v352, %v351
  %v378 = vpack.c.b16 %v354, %v353
  %v379 = vpack.c.b16 %v356, %v355
  %v380 = vpack.c.b16 %v358, %v357
  %v381 = vpack.c.b16 %v360, %v359
  %v382 = vpack.c.b16 %v362, %v361
  %v383 = vpack.c.b16 %v364, %v363
  %v384 = vpack.c.b16 %v366, %v365
  %v385 = vpack.c.b16 %v368, %v367
  %v386 = vpack.c.b16 %v370, %v369
  %403 = vmatprep.subr.bf16.mxu0 0
  %404 = vmatpush1.bf16.msra.mxu0 %v371
  %405 = vmatprep.subr.bf16.mxu0 0
  %406 = vmatpush1.bf16.msra.mxu0 %v372
  %407 = vmatprep.subr.bf16.mxu0 0
  %408 = vmatpush1.bf16.msra.mxu0 %v373
  %409 = vmatprep.subr.bf16.mxu0 0
  %410 = vmatpush1.bf16.msra.mxu0 %v374
  %411 = vmatprep.subr.bf16.mxu0 0
  %412 = vmatpush1.bf16.msra.mxu0 %v375
  %413 = vmatprep.subr.bf16.mxu0 0
  %414 = vmatpush1.bf16.msra.mxu0 %v376
  %415 = vmatprep.subr.bf16.mxu0 0
  %416 = vmatpush1.bf16.msra.mxu0 %v377
  %417 = vmatprep.subr.bf16.mxu0 0
  %418 = vmatpush1.bf16.msra.mxu0 %v378
  %419 = vmatprep.subr.bf16.mxu0 0
  %420 = vmatpush1.bf16.msra.mxu0 %v379
  %421 = vmatprep.subr.bf16.mxu0 0
  %422 = vmatpush1.bf16.msra.mxu0 %v380
  %423 = vmatprep.subr.bf16.mxu0 0
  %424 = vmatpush1.bf16.msra.mxu0 %v381
  %425 = vmatprep.subr.bf16.mxu0 0
  %426 = vmatpush1.bf16.msra.mxu0 %v382
  %427 = vmatprep.subr.bf16.mxu0 0
  %428 = vmatpush1.bf16.msra.mxu0 %v383
  %429 = vmatprep.subr.bf16.mxu0 0
  %430 = vmatpush1.bf16.msra.mxu0 %v384
  %431 = vmatprep.subr.bf16.mxu0 0
  %432 = vmatpush1.bf16.msra.mxu0 %v385
  %433 = vmatprep.subr.bf16.mxu0 0
  %434 = vmatpush1.bf16.msra.mxu0 %v386
  %435 = vmatprep.mubr.bf16.mxu0 %v244
  %436 = vmatmul.mubr.bf16.gmra.mrb[0].mxu0 %v243
  %v437 = vpop.f32.mrb[0].mxu0
  %v438 = vadd.f32 0.0, %v437
  %v439 = vpop.f32.mrb[0].mxu0
  %v440 = vpop.f32.mrb[0].mxu0
  %v441 = vadd.f32 0.0, %v440
  %v442 = vpop.f32.mrb[0].mxu0
  %443 = vmatprep.mubr.bf16.mxu0 %v246
  %444 = vmatmul.mubr.bf16.gmra.mrb[0].mxu0 %v245
  %v445 = vpop.f32.mrb[0].mxu0
  %v446 = vadd.f32 0.0, %v445
  %v447 = vpop.f32.mrb[0].mxu0
  %v448 = vpop.f32.mrb[0].mxu0
  %v449 = vadd.f32 0.0, %v448
  %v450 = vpop.f32.mrb[0].mxu0
  %451 = vmatprep.mubr.bf16.mxu0 %v248
  %452 = vmatmul.mubr.bf16.gmra.mrb[0].mxu0 %v247
  %v453 = vpop.f32.mrb[0].mxu0
  %v454 = vadd.f32 0.0, %v453
  %v455 = vpop.f32.mrb[0].mxu0
  %v456 = vpop.f32.mrb[0].mxu0
  %v457 = vadd.f32 0.0, %v456
  %v458 = vpop.f32.mrb[0].mxu0
  %459 = vmatprep.mubr.bf16.mxu0 %v250
  %460 = vmatmul.mubr.bf16.gmra.mrb[0].mxu0 %v249
  %v461 = vpop.f32.mrb[0].mxu0
  %v462 = vadd.f32 0.0, %v461
  %v463 = vpop.f32.mrb[0].mxu0
  %v464 = vpop.f32.mrb[0].mxu0
  %v465 = vadd.f32 0.0, %v464
  %v466 = vpop.f32.mrb[0].mxu0
  %467 = vmatprep.mubr.bf16.mxu0 %v252
  %468 = vmatmul.mubr.bf16.gmra.mrb[0].mxu0 %v251
  %v469 = vpop.f32.mrb[0].mxu0
  %v470 = vadd.f32 0.0, %v469
  %v471 = vpop.f32.mrb[0].mxu0
  %v472 = vpop.f32.mrb[0].mxu0
  %v473 = vadd.f32 0.0, %v472
  %v474 = vpop.f32.mrb[0].mxu0
  %475 = vmatprep.mubr.bf16.mxu0 %v254
  %476 = vmatmul.mubr.bf16.gmra.mrb[0].mxu0 %v253
  %v477 = vpop.f32.mrb[0].mxu0
  %v478 = vadd.f32 0.0, %v477
  %v479 = vpop.f32.mrb[0].mxu0
  %v480 = vpop.f32.mrb[0].mxu0
  %v481 = vadd.f32 0.0, %v480
  %v482 = vpop.f32.mrb[0].mxu0
  %483 = vmatprep.mubr.bf16.mxu0 %v256
  %484 = vmatmul.mubr.bf16.gmra.mrb[0].mxu0 %v255
  %v485 = vpop.f32.mrb[0].mxu0
  %v486 = vadd.f32 0.0, %v485
  %v487 = vpop.f32.mrb[0].mxu0
  %v488 = vpop.f32.mrb[0].mxu0
  %v489 = vadd.f32 0.0, %v488
  %v490 = vpop.f32.mrb[0].mxu0
  %491 = vmatprep.mubr.bf16.mxu0 %v258
  %492 = vmatmul.mubr.bf16.gmra.mrb[0].mxu0 %v257
  %v493 = vpop.f32.mrb[0].mxu0
  %v494 = vadd.f32 0.0, %v493
  %v495 = vpop.f32.mrb[0].mxu0
  %v496 = vpop.f32.mrb[0].mxu0
  %v497 = vadd.f32 0.0, %v496
  %v498 = vpop.f32.mrb[0].mxu0
  %499 = vmatprep.mubr.bf16.mxu0 %v260
  %500 = vmatmul.mubr.bf16.gmra.mrb[0].mxu0 %v259
  %v501 = vpop.f32.mrb[0].mxu0
  %v502 = vadd.f32 0.0, %v501
  %v503 = vpop.f32.mrb[0].mxu0
  %v504 = vpop.f32.mrb[0].mxu0
  %v505 = vadd.f32 0.0, %v504
  %v506 = vpop.f32.mrb[0].mxu0
  %507 = vmatprep.mubr.bf16.mxu0 %v262
  %508 = vmatmul.mubr.bf16.gmra.mrb[0].mxu0 %v261
  %v509 = vpop.f32.mrb[0].mxu0
  %v510 = vadd.f32 0.0, %v509
  %v511 = vpop.f32.mrb[0].mxu0
  %v512 = vpop.f32.mrb[0].mxu0
  %v513 = vadd.f32 0.0, %v512
  %v514 = vpop.f32.mrb[0].mxu0
  %515 = vmatprep.mubr.bf16.mxu0 %v264
  %516 = vmatmul.mubr.bf16.gmra.mrb[0].mxu0 %v263
  %v517 = vpop.f32.mrb[0].mxu0
  %v518 = vadd.f32 0.0, %v517
  %v519 = vpop.f32.mrb[0].mxu0
  %v520 = vpop.f32.mrb[0].mxu0
  %v521 = vadd.f32 0.0, %v520
  %v522 = vpop.f32.mrb[0].mxu0
  %523 = vmatprep.mubr.bf16.mxu0 %v266
  %524 = vmatmul.mubr.bf16.gmra.mrb[0].mxu0 %v265
  %v525 = vpop.f32.mrb[0].mxu0
  %v526 = vadd.f32 0.0, %v525
  %v527 = vpop.f32.mrb[0].mxu0
  %v528 = vpop.f32.mrb[0].mxu0
  %v529 = vadd.f32 0.0, %v528
  %v530 = vpop.f32.mrb[0].mxu0
  %531 = vmatprep.mubr.bf16.mxu0 %v268
  %532 = vmatmul.mubr.bf16.gmra.mrb[0].mxu0 %v267
  %v533 = vpop.f32.mrb[0].mxu0
  %v534 = vadd.f32 0.0, %v533
  %v535 = vpop.f32.mrb[0].mxu0
  %v536 = vpop.f32.mrb[0].mxu0
  %v537 = vadd.f32 0.0, %v536
  %v538 = vpop.f32.mrb[0].mxu0
  %539 = vmatprep.mubr.bf16.mxu0 %v270
  %540 = vmatmul.mubr.bf16.gmra.mrb[0].mxu0 %v269
  %v541 = vpop.f32.mrb[0].mxu0
  %v542 = vadd.f32 0.0, %v541
  %v543 = vpop.f32.mrb[0].mxu0
  %v544 = vpop.f32.mrb[0].mxu0
  %v545 = vadd.f32 0.0, %v544
  %v546 = vpop.f32.mrb[0].mxu0
  %547 = vmatprep.mubr.bf16.mxu0 %v272
  %548 = vmatmul.mubr.bf16.gmra.mrb[0].mxu0 %v271
  %v549 = vpop.f32.mrb[0].mxu0
  %v550 = vadd.f32 0.0, %v549
  %v551 = vpop.f32.mrb[0].mxu0
  %v552 = vpop.f32.mrb[0].mxu0
  %v553 = vadd.f32 0.0, %v552
  %v554 = vpop.f32.mrb[0].mxu0
  %555 = vmatprep.mubr.bf16.mxu0 %v274
  %556 = vmatmul.mubr.bf16.gmra.mrb[0].mxu0 %v273
  %v557 = vpop.f32.mrb[0].mxu0
  %v558 = vadd.f32 0.0, %v557
  %v559 = vpop.f32.mrb[0].mxu0
  %v560 = vpop.f32.mrb[0].mxu0
  %v561 = vadd.f32 0.0, %v560
  %v562 = vpop.f32.mrb[0].mxu0
  %563 = vdwg.mxu0
  %v564 = vadd.f32 %v51, %v438
  %v565 = vadd.f32 %v52, %v441
  %v566 = vadd.f32 %v53, %v446
  %v567 = vadd.f32 %v54, %v449
  %v568 = vadd.f32 %v55, %v454
  %v569 = vadd.f32 %v56, %v457
  %v570 = vadd.f32 %v57, %v462
  %v571 = vadd.f32 %v58, %v465
  %v572 = vadd.f32 %v59, %v470
  %v573 = vadd.f32 %v60, %v473
  %v574 = vadd.f32 %v61, %v478
  %v575 = vadd.f32 %v62, %v481
  %v576 = vadd.f32 %v63, %v486
  %v577 = vadd.f32 %v64, %v489
  %v578 = vadd.f32 %v65, %v494
  %v579 = vadd.f32 %v66, %v497
  %v580 = vadd.f32 %v67, %v502
  %v581 = vadd.f32 %v68, %v505
  %v582 = vadd.f32 %v69, %v510
  %v583 = vadd.f32 %v70, %v513
  %v584 = vadd.f32 %v71, %v518
  %v585 = vadd.f32 %v72, %v521
  %v586 = vadd.f32 %v73, %v526
  %v587 = vadd.f32 %v74, %v529
  %v588 = vadd.f32 %v75, %v534
  %v589 = vadd.f32 %v76, %v537
  %v590 = vadd.f32 %v77, %v542
  %v591 = vadd.f32 %v78, %v545
  %v592 = vadd.f32 %v79, %v550
  %v593 = vadd.f32 %v80, %v553
  %v594 = vadd.f32 %v81, %v558
  %v595 = vadd.f32 %v82, %v561
  %596 = vst [vmem:[#allocation2] sm:$0xff] %v564
  %597 = vst [vmem:[#allocation2 + $0x8] sm:$0xff] %v565
  %598 = vst [vmem:[#allocation2 + $0x10] sm:$0xff] %v566
  %599 = vst [vmem:[#allocation2 + $0x18] sm:$0xff] %v567
  %600 = vst [vmem:[#allocation2 + $0x20] sm:$0xff] %v568
  %601 = vst [vmem:[#allocation2 + $0x28] sm:$0xff] %v569
  %602 = vst [vmem:[#allocation2 + $0x30] sm:$0xff] %v570
  %603 = vst [vmem:[#allocation2 + $0x38] sm:$0xff] %v571
  %604 = vst [vmem:[#allocation2 + $0x40] sm:$0xff] %v572
  %605 = vst [vmem:[#allocation2 + $0x48] sm:$0xff] %v573
  %606 = vst [vmem:[#allocation2 + $0x50] sm:$0xff] %v574
  %607 = vst [vmem:[#allocation2 + $0x58] sm:$0xff] %v575
  %608 = vst [vmem:[#allocation2 + $0x60] sm:$0xff] %v576
  %609 = vst [vmem:[#allocation2 + $0x68] sm:$0xff] %v577
  %610 = vst [vmem:[#allocation2 + $0x70] sm:$0xff] %v578
  %611 = vst [vmem:[#allocation2 + $0x78] sm:$0xff] %v579
  %612 = vst [vmem:[#allocation2 + $0x80] sm:$0xff] %v580
  %613 = vst [vmem:[#allocation2 + $0x88] sm:$0xff] %v581
  %614 = vst [vmem:[#allocation2 + $0x90] sm:$0xff] %v582
  %615 = vst [vmem:[#allocation2 + $0x98] sm:$0xff] %v583
  %616 = vst [vmem:[#allocation2 + $0xa0] sm:$0xff] %v584
  %617 = vst [vmem:[#allocation2 + $0xa8] sm:$0xff] %v585
  %618 = vst [vmem:[#allocation2 + $0xb0] sm:$0xff] %v586
  %619 = vst [vmem:[#allocation2 + $0xb8] sm:$0xff] %v587
  %620 = vst [vmem:[#allocation2 + $0xc0] sm:$0xff] %v588
  %621 = vst [vmem:[#allocation2 + $0xc8] sm:$0xff] %v589
  %622 = vst [vmem:[#allocation2 + $0xd0] sm:$0xff] %v590
  %623 = vst [vmem:[#allocation2 + $0xd8] sm:$0xff] %v591
  %624 = vst [vmem:[#allocation2 + $0xe0] sm:$0xff] %v592
  %625 = vst [vmem:[#allocation2 + $0xe8] sm:$0xff] %v593
  %626 = vst [vmem:[#allocation2 + $0xf0] sm:$0xff] %v594
  %627 = vst [vmem:[#allocation2 + $0xf8] sm:$0xff] %v595
  // Predicated region
  $region18: #{gcn_forward.11} parent=0 // pred_check
    %p628 = pneg %p15
  $region19: #{gcn_forward.11} parent=0 // pred_check_branch
    %630 = sbr.rel (%p628) target = $region21
  $region20: #{gcn_forward.11} parent=0 // pred_region
    %v631 = vld [vmem:[#allocation2] sm:$0xff]
    %v632 = vld [vmem:[#allocation2 + $0x8] sm:$0xff]
    %v633 = vld [vmem:[#allocation2 + $0x10] sm:$0xff]
    %v634 = vld [vmem:[#allocation2 + $0x18] sm:$0xff]
    %v635 = vld [vmem:[#allocation2 + $0x20] sm:$0xff]
    %v636 = vld [vmem:[#allocation2 + $0x28] sm:$0xff]
    %v637 = vld [vmem:[#allocation2 + $0x30] sm:$0xff]
    %v638 = vld [vmem:[#allocation2 + $0x38] sm:$0xff]
    %v639 = vld [vmem:[#allocation2 + $0x40] sm:$0xff]
    %v640 = vld [vmem:[#allocation2 + $0x48] sm:$0xff]
    %v641 = vld [vmem:[#allocation2 + $0x50] sm:$0xff]
    %v642 = vld [vmem:[#allocation2 + $0x58] sm:$0xff]
    %v643 = vld [vmem:[#allocation2 + $0x60] sm:$0xff]
    %v644 = vld [vmem:[#allocation2 + $0x68] sm:$0xff]
    %v645 = vld [vmem:[#allocation2 + $0x70] sm:$0xff]
    %v646 = vld [vmem:[#allocation2 + $0x78] sm:$0xff]
    %v647 = vld [vmem:[#allocation2 + $0x80] sm:$0xff]
    %v648 = vld [vmem:[#allocation2 + $0x88] sm:$0xff]
    %v649 = vld [vmem:[#allocation2 + $0x90] sm:$0xff]
    %v650 = vld [vmem:[#allocation2 + $0x98] sm:$0xff]
    %v651 = vld [vmem:[#allocation2 + $0xa0] sm:$0xff]
    %v652 = vld [vmem:[#allocation2 + $0xa8] sm:$0xff]
    %v653 = vld [vmem:[#allocation2 + $0xb0] sm:$0xff]
    %v654 = vld [vmem:[#allocation2 + $0xb8] sm:$0xff]
    %v655 = vld [vmem:[#allocation2 + $0xc0] sm:$0xff]
    %v656 = vld [vmem:[#allocation2 + $0xc8] sm:$0xff]
    %v657 = vld [vmem:[#allocation2 + $0xd0] sm:$0xff]
    %v658 = vld [vmem:[#allocation2 + $0xd8] sm:$0xff]
    %v659 = vld [vmem:[#allocation2 + $0xe0] sm:$0xff]
    %v660 = vld [vmem:[#allocation2 + $0xe8] sm:$0xff]
    %v661 = vld [vmem:[#allocation2 + $0xf0] sm:$0xff]
    %v662 = vld [vmem:[#allocation2 + $0xf8] sm:$0xff]
    %v663 = vld [vmem:[%s2] sm:$0x1]
    %v665 = vlaneseq
    %v666 = vshrl.u32 %v665, 7
    %v667 = vsub.s32 0, %v666
    %v668 = vrot.slane %v663, %v667
    %v670 = vadd.f32 %v631, %v668
    %v671 = vadd.f32 %v632, %v668
    %v672 = vadd.f32 %v633, %v668
    %v673 = vadd.f32 %v634, %v668
    %v674 = vadd.f32 %v635, %v668
    %v675 = vadd.f32 %v636, %v668
    %v676 = vadd.f32 %v637, %v668
    %v677 = vadd.f32 %v638, %v668
    %v678 = vadd.f32 %v639, %v668
    %v679 = vadd.f32 %v640, %v668
    %v680 = vadd.f32 %v641, %v668
    %v681 = vadd.f32 %v642, %v668
    %v682 = vadd.f32 %v643, %v668
    %v683 = vadd.f32 %v644, %v668
    %v684 = vadd.f32 %v645, %v668
    %v685 = vadd.f32 %v646, %v668
    %v686 = vadd.f32 %v647, %v668
    %v687 = vadd.f32 %v648, %v668
    %v688 = vadd.f32 %v649, %v668
    %v689 = vadd.f32 %v650, %v668
    %v690 = vadd.f32 %v651, %v668
    %v691 = vadd.f32 %v652, %v668
    %v692 = vadd.f32 %v653, %v668
    %v693 = vadd.f32 %v654, %v668
    %v694 = vadd.f32 %v655, %v668
    %v695 = vadd.f32 %v656, %v668
    %v696 = vadd.f32 %v657, %v668
    %v697 = vadd.f32 %v658, %v668
    %v698 = vadd.f32 %v659, %v668
    %v699 = vadd.f32 %v660, %v668
    %v700 = vadd.f32 %v661, %v668
    %v701 = vadd.f32 %v662, %v668
    %v702 = vlaneseq
    %v703 = vand.u32 %v702, 127
    %vm704 = vcmp.lt.s32.totalorder %v703, 8
    %v705 = vsel %vm704, %v670, -1e+30
    %v706 = vsel %vm704, %v671, -1e+30
    %v707 = vsel %vm704, %v672, -1e+30
    %v708 = vsel %vm704, %v673, -1e+30
    %v709 = vsel %vm704, %v674, -1e+30
    %v710 = vsel %vm704, %v675, -1e+30
    %v711 = vsel %vm704, %v676, -1e+30
    %v712 = vsel %vm704, %v677, -1e+30
    %v713 = vsel %vm704, %v678, -1e+30
    %v714 = vsel %vm704, %v679, -1e+30
    %v715 = vsel %vm704, %v680, -1e+30
    %v716 = vsel %vm704, %v681, -1e+30
    %v717 = vsel %vm704, %v682, -1e+30
    %v718 = vsel %vm704, %v683, -1e+30
    %v719 = vsel %vm704, %v684, -1e+30
    %v720 = vsel %vm704, %v685, -1e+30
    %v721 = vsel %vm704, %v686, -1e+30
    %v722 = vsel %vm704, %v687, -1e+30
    %v723 = vsel %vm704, %v688, -1e+30
    %v724 = vsel %vm704, %v689, -1e+30
    %v725 = vsel %vm704, %v690, -1e+30
    %v726 = vsel %vm704, %v691, -1e+30
    %v727 = vsel %vm704, %v692, -1e+30
    %v728 = vsel %vm704, %v693, -1e+30
    %v729 = vsel %vm704, %v694, -1e+30
    %v730 = vsel %vm704, %v695, -1e+30
    %v731 = vsel %vm704, %v696, -1e+30
    %v732 = vsel %vm704, %v697, -1e+30
    %v733 = vsel %vm704, %v698, -1e+30
    %v734 = vsel %vm704, %v699, -1e+30
    %v735 = vsel %vm704, %v700, -1e+30
    %v736 = vsel %vm704, %v701, -1e+30
    %737 = vmax.xlane.f32.xlu0 %v705
    %v738 = vpop.xlane.xlu0 %737
    %739 = vmax.xlane.f32.xlu0 %v706
    %v740 = vpop.xlane.xlu0 %739
    %741 = vmax.xlane.f32.xlu0 %v707
    %v742 = vpop.xlane.xlu0 %741
    %743 = vmax.xlane.f32.xlu0 %v708
    %v744 = vpop.xlane.xlu0 %743
    %745 = vmax.xlane.f32.xlu0 %v709
    %v746 = vpop.xlane.xlu0 %745
    %747 = vmax.xlane.f32.xlu0 %v710
    %v748 = vpop.xlane.xlu0 %747
    %749 = vmax.xlane.f32.xlu0 %v711
    %v750 = vpop.xlane.xlu0 %749
    %751 = vmax.xlane.f32.xlu0 %v712
    %v752 = vpop.xlane.xlu0 %751
    %753 = vmax.xlane.f32.xlu0 %v713
    %v754 = vpop.xlane.xlu0 %753
    %755 = vmax.xlane.f32.xlu0 %v714
    %v756 = vpop.xlane.xlu0 %755
    %757 = vmax.xlane.f32.xlu0 %v715
    %v758 = vpop.xlane.xlu0 %757
    %759 = vmax.xlane.f32.xlu0 %v716
    %v760 = vpop.xlane.xlu0 %759
    %761 = vmax.xlane.f32.xlu0 %v717
    %v762 = vpop.xlane.xlu0 %761
    %763 = vmax.xlane.f32.xlu0 %v718
    %v764 = vpop.xlane.xlu0 %763
    %765 = vmax.xlane.f32.xlu0 %v719
    %v766 = vpop.xlane.xlu0 %765
    %767 = vmax.xlane.f32.xlu0 %v720
    %v768 = vpop.xlane.xlu0 %767
    %769 = vmax.xlane.f32.xlu0 %v721
    %v770 = vpop.xlane.xlu0 %769
    %771 = vmax.xlane.f32.xlu0 %v722
    %v772 = vpop.xlane.xlu0 %771
    %773 = vmax.xlane.f32.xlu0 %v723
    %v774 = vpop.xlane.xlu0 %773
    %775 = vmax.xlane.f32.xlu0 %v724
    %v776 = vpop.xlane.xlu0 %775
    %777 = vmax.xlane.f32.xlu0 %v725
    %v778 = vpop.xlane.xlu0 %777
    %779 = vmax.xlane.f32.xlu0 %v726
    %v780 = vpop.xlane.xlu0 %779
    %781 = vmax.xlane.f32.xlu0 %v727
    %v782 = vpop.xlane.xlu0 %781
    %783 = vmax.xlane.f32.xlu0 %v728
    %v784 = vpop.xlane.xlu0 %783
    %785 = vmax.xlane.f32.xlu0 %v729
    %v786 = vpop.xlane.xlu0 %785
    %787 = vmax.xlane.f32.xlu0 %v730
    %v788 = vpop.xlane.xlu0 %787
    %789 = vmax.xlane.f32.xlu0 %v731
    %v790 = vpop.xlane.xlu0 %789
    %791 = vmax.xlane.f32.xlu0 %v732
    %v792 = vpop.xlane.xlu0 %791
    %793 = vmax.xlane.f32.xlu0 %v733
    %v794 = vpop.xlane.xlu0 %793
    %795 = vmax.xlane.f32.xlu0 %v734
    %v796 = vpop.xlane.xlu0 %795
    %797 = vmax.xlane.f32.xlu0 %v735
    %v798 = vpop.xlane.xlu0 %797
    %799 = vmax.xlane.f32.xlu0 %v736
    %v800 = vpop.xlane.xlu0 %799
    %v801 = vsub.f32 %v705, %v738
    %v802 = vsub.f32 %v706, %v740
    %v803 = vsub.f32 %v707, %v742
    %v804 = vsub.f32 %v708, %v744
    %v805 = vsub.f32 %v709, %v746
    %v806 = vsub.f32 %v710, %v748
    %v807 = vsub.f32 %v711, %v750
    %v808 = vsub.f32 %v712, %v752
    %v809 = vsub.f32 %v713, %v754
    %v810 = vsub.f32 %v714, %v756
    %v811 = vsub.f32 %v715, %v758
    %v812 = vsub.f32 %v716, %v760
    %v813 = vsub.f32 %v717, %v762
    %v814 = vsub.f32 %v718, %v764
    %v815 = vsub.f32 %v719, %v766
    %v816 = vsub.f32 %v720, %v768
    %v817 = vsub.f32 %v721, %v770
    %v818 = vsub.f32 %v722, %v772
    %v819 = vsub.f32 %v723, %v774
    %v820 = vsub.f32 %v724, %v776
    %v821 = vsub.f32 %v725, %v778
    %v822 = vsub.f32 %v726, %v780
    %v823 = vsub.f32 %v727, %v782
    %v824 = vsub.f32 %v728, %v784
    %v825 = vsub.f32 %v729, %v786
    %v826 = vsub.f32 %v730, %v788
    %v827 = vsub.f32 %v731, %v790
    %v828 = vsub.f32 %v732, %v792
    %v829 = vsub.f32 %v733, %v794
    %v830 = vsub.f32 %v734, %v796
    %v831 = vsub.f32 %v735, %v798
    %v832 = vsub.f32 %v736, %v800
    %v833 = vmul.f32 %v801, 1.442695
    %v834 = vpow.pop %v833
    %v835 = vmul.f32 %v802, 1.442695
    %v836 = vpow.pop %v835
    %v837 = vmul.f32 %v803, 1.442695
    %v838 = vpow.pop %v837
    %v839 = vmul.f32 %v804, 1.442695
    %v840 = vpow.pop %v839
    %v841 = vmul.f32 %v805, 1.442695
    %v842 = vpow.pop %v841
    %v843 = vmul.f32 %v806, 1.442695
    %v844 = vpow.pop %v843
    %v845 = vmul.f32 %v807, 1.442695
    %v846 = vpow.pop %v845
    %v847 = vmul.f32 %v808, 1.442695
    %v848 = vpow.pop %v847
    %v849 = vmul.f32 %v809, 1.442695
    %v850 = vpow.pop %v849
    %v851 = vmul.f32 %v810, 1.442695
    %v852 = vpow.pop %v851
    %v853 = vmul.f32 %v811, 1.442695
    %v854 = vpow.pop %v853
    %v855 = vmul.f32 %v812, 1.442695
    %v856 = vpow.pop %v855
    %v857 = vmul.f32 %v813, 1.442695
    %v858 = vpow.pop %v857
    %v859 = vmul.f32 %v814, 1.442695
    %v860 = vpow.pop %v859
    %v861 = vmul.f32 %v815, 1.442695
    %v862 = vpow.pop %v861
    %v863 = vmul.f32 %v816, 1.442695
    %v864 = vpow.pop %v863
    %v865 = vmul.f32 %v817, 1.442695
    %v866 = vpow.pop %v865
    %v867 = vmul.f32 %v818, 1.442695
    %v868 = vpow.pop %v867
    %v869 = vmul.f32 %v819, 1.442695
    %v870 = vpow.pop %v869
    %v871 = vmul.f32 %v820, 1.442695
    %v872 = vpow.pop %v871
    %v873 = vmul.f32 %v821, 1.442695
    %v874 = vpow.pop %v873
    %v875 = vmul.f32 %v822, 1.442695
    %v876 = vpow.pop %v875
    %v877 = vmul.f32 %v823, 1.442695
    %v878 = vpow.pop %v877
    %v879 = vmul.f32 %v824, 1.442695
    %v880 = vpow.pop %v879
    %v881 = vmul.f32 %v825, 1.442695
    %v882 = vpow.pop %v881
    %v883 = vmul.f32 %v826, 1.442695
    %v884 = vpow.pop %v883
    %v885 = vmul.f32 %v827, 1.442695
    %v886 = vpow.pop %v885
    %v887 = vmul.f32 %v828, 1.442695
    %v888 = vpow.pop %v887
    %v889 = vmul.f32 %v829, 1.442695
    %v890 = vpow.pop %v889
    %v891 = vmul.f32 %v830, 1.442695
    %v892 = vpow.pop %v891
    %v893 = vmul.f32 %v831, 1.442695
    %v894 = vpow.pop %v893
    %v895 = vmul.f32 %v832, 1.442695
    %v896 = vpow.pop %v895
    %897 = vadd.xlane.f32.xlu0 %v834
    %v898 = vpop.xlane.xlu0 %897
    %899 = vadd.xlane.f32.xlu0 %v836
    %v900 = vpop.xlane.xlu0 %899
    %901 = vadd.xlane.f32.xlu0 %v838
    %v902 = vpop.xlane.xlu0 %901
    %903 = vadd.xlane.f32.xlu0 %v840
    %v904 = vpop.xlane.xlu0 %903
    %905 = vadd.xlane.f32.xlu0 %v842
    %v906 = vpop.xlane.xlu0 %905
    %907 = vadd.xlane.f32.xlu0 %v844
    %v908 = vpop.xlane.xlu0 %907
    %909 = vadd.xlane.f32.xlu0 %v846
    %v910 = vpop.xlane.xlu0 %909
    %911 = vadd.xlane.f32.xlu0 %v848
    %v912 = vpop.xlane.xlu0 %911
    %913 = vadd.xlane.f32.xlu0 %v850
    %v914 = vpop.xlane.xlu0 %913
    %915 = vadd.xlane.f32.xlu0 %v852
    %v916 = vpop.xlane.xlu0 %915
    %917 = vadd.xlane.f32.xlu0 %v854
    %v918 = vpop.xlane.xlu0 %917
    %919 = vadd.xlane.f32.xlu0 %v856
    %v920 = vpop.xlane.xlu0 %919
    %921 = vadd.xlane.f32.xlu0 %v858
    %v922 = vpop.xlane.xlu0 %921
    %923 = vadd.xlane.f32.xlu0 %v860
    %v924 = vpop.xlane.xlu0 %923
    %925 = vadd.xlane.f32.xlu0 %v862
    %v926 = vpop.xlane.xlu0 %925
    %927 = vadd.xlane.f32.xlu0 %v864
    %v928 = vpop.xlane.xlu0 %927
    %929 = vadd.xlane.f32.xlu0 %v866
    %v930 = vpop.xlane.xlu0 %929
    %931 = vadd.xlane.f32.xlu0 %v868
    %v932 = vpop.xlane.xlu0 %931
    %933 = vadd.xlane.f32.xlu0 %v870
    %v934 = vpop.xlane.xlu0 %933
    %935 = vadd.xlane.f32.xlu0 %v872
    %v936 = vpop.xlane.xlu0 %935
    %937 = vadd.xlane.f32.xlu0 %v874
    %v938 = vpop.xlane.xlu0 %937
    %939 = vadd.xlane.f32.xlu0 %v876
    %v940 = vpop.xlane.xlu0 %939
    %941 = vadd.xlane.f32.xlu0 %v878
    %v942 = vpop.xlane.xlu0 %941
    %943 = vadd.xlane.f32.xlu0 %v880
    %v944 = vpop.xlane.xlu0 %943
    %945 = vadd.xlane.f32.xlu0 %v882
    %v946 = vpop.xlane.xlu0 %945
    %947 = vadd.xlane.f32.xlu0 %v884
    %v948 = vpop.xlane.xlu0 %947
    %949 = vadd.xlane.f32.xlu0 %v886
    %v950 = vpop.xlane.xlu0 %949
    %951 = vadd.xlane.f32.xlu0 %v888
    %v952 = vpop.xlane.xlu0 %951
    %953 = vadd.xlane.f32.xlu0 %v890
    %v954 = vpop.xlane.xlu0 %953
    %955 = vadd.xlane.f32.xlu0 %v892
    %v956 = vpop.xlane.xlu0 %955
    %957 = vadd.xlane.f32.xlu0 %v894
    %v958 = vpop.xlane.xlu0 %957
    %959 = vadd.xlane.f32.xlu0 %v896
    %v960 = vpop.xlane.xlu0 %959
    %v961 = vlog2.pop %v898
    %v962 = vmul.f32 %v961, 0.6931472
    %v963 = vlog2.pop %v900
    %v964 = vmul.f32 %v963, 0.6931472
    %v965 = vlog2.pop %v902
    %v966 = vmul.f32 %v965, 0.6931472
    %v967 = vlog2.pop %v904
    %v968 = vmul.f32 %v967, 0.6931472
    %v969 = vlog2.pop %v906
    %v970 = vmul.f32 %v969, 0.6931472
    %v971 = vlog2.pop %v908
    %v972 = vmul.f32 %v971, 0.6931472
    %v973 = vlog2.pop %v910
    %v974 = vmul.f32 %v973, 0.6931472
    %v975 = vlog2.pop %v912
    %v976 = vmul.f32 %v975, 0.6931472
    %v977 = vlog2.pop %v914
    %v978 = vmul.f32 %v977, 0.6931472
    %v979 = vlog2.pop %v916
    %v980 = vmul.f32 %v979, 0.6931472
    %v981 = vlog2.pop %v918
    %v982 = vmul.f32 %v981, 0.6931472
    %v983 = vlog2.pop %v920
    %v984 = vmul.f32 %v983, 0.6931472
    %v985 = vlog2.pop %v922
    %v986 = vmul.f32 %v985, 0.6931472
    %v987 = vlog2.pop %v924
    %v988 = vmul.f32 %v987, 0.6931472
    %v989 = vlog2.pop %v926
    %v990 = vmul.f32 %v989, 0.6931472
    %v991 = vlog2.pop %v928
    %v992 = vmul.f32 %v991, 0.6931472
    %v993 = vlog2.pop %v930
    %v994 = vmul.f32 %v993, 0.6931472
    %v995 = vlog2.pop %v932
    %v996 = vmul.f32 %v995, 0.6931472
    %v997 = vlog2.pop %v934
    %v998 = vmul.f32 %v997, 0.6931472
    %v999 = vlog2.pop %v936
    %v1000 = vmul.f32 %v999, 0.6931472
    %v1001 = vlog2.pop %v938
    %v1002 = vmul.f32 %v1001, 0.6931472
    %v1003 = vlog2.pop %v940
    %v1004 = vmul.f32 %v1003, 0.6931472
    %v1005 = vlog2.pop %v942
    %v1006 = vmul.f32 %v1005, 0.6931472
    %v1007 = vlog2.pop %v944
    %v1008 = vmul.f32 %v1007, 0.6931472
    %v1009 = vlog2.pop %v946
    %v1010 = vmul.f32 %v1009, 0.6931472
    %v1011 = vlog2.pop %v948
    %v1012 = vmul.f32 %v1011, 0.6931472
    %v1013 = vlog2.pop %v950
    %v1014 = vmul.f32 %v1013, 0.6931472
    %v1015 = vlog2.pop %v952
    %v1016 = vmul.f32 %v1015, 0.6931472
    %v1017 = vlog2.pop %v954
    %v1018 = vmul.f32 %v1017, 0.6931472
    %v1019 = vlog2.pop %v956
    %v1020 = vmul.f32 %v1019, 0.6931472
    %v1021 = vlog2.pop %v958
    %v1022 = vmul.f32 %v1021, 0.6931472
    %v1023 = vlog2.pop %v960
    %v1024 = vmul.f32 %v1023, 0.6931472
    %v1025 = vsub.f32 %v801, %v962
    %v1026 = vsub.f32 %v802, %v964
    %v1027 = vsub.f32 %v803, %v966
    %v1028 = vsub.f32 %v804, %v968
    %v1029 = vsub.f32 %v805, %v970
    %v1030 = vsub.f32 %v806, %v972
    %v1031 = vsub.f32 %v807, %v974
    %v1032 = vsub.f32 %v808, %v976
    %v1033 = vsub.f32 %v809, %v978
    %v1034 = vsub.f32 %v810, %v980
    %v1035 = vsub.f32 %v811, %v982
    %v1036 = vsub.f32 %v812, %v984
    %v1037 = vsub.f32 %v813, %v986
    %v1038 = vsub.f32 %v814, %v988
    %v1039 = vsub.f32 %v815, %v990
    %v1040 = vsub.f32 %v816, %v992
    %v1041 = vsub.f32 %v817, %v994
    %v1042 = vsub.f32 %v818, %v996
    %v1043 = vsub.f32 %v819, %v998
    %v1044 = vsub.f32 %v820, %v1000
    %v1045 = vsub.f32 %v821, %v1002
    %v1046 = vsub.f32 %v822, %v1004
    %v1047 = vsub.f32 %v823, %v1006
    %v1048 = vsub.f32 %v824, %v1008
    %v1049 = vsub.f32 %v825, %v1010
    %v1050 = vsub.f32 %v826, %v1012
    %v1051 = vsub.f32 %v827, %v1014
    %v1052 = vsub.f32 %v828, %v1016
    %v1053 = vsub.f32 %v829, %v1018
    %v1054 = vsub.f32 %v830, %v1020
    %v1055 = vsub.f32 %v831, %v1022
    %v1056 = vsub.f32 %v832, %v1024
    %v1057 = vsel %vm704, %v1025, 0.0
    %v1058 = vsel %vm704, %v1026, 0.0
    %v1059 = vsel %vm704, %v1027, 0.0
    %v1060 = vsel %vm704, %v1028, 0.0
    %v1061 = vsel %vm704, %v1029, 0.0
    %v1062 = vsel %vm704, %v1030, 0.0
    %v1063 = vsel %vm704, %v1031, 0.0
    %v1064 = vsel %vm704, %v1032, 0.0
    %v1065 = vsel %vm704, %v1033, 0.0
    %v1066 = vsel %vm704, %v1034, 0.0
    %v1067 = vsel %vm704, %v1035, 0.0
    %v1068 = vsel %vm704, %v1036, 0.0
    %v1069 = vsel %vm704, %v1037, 0.0
    %v1070 = vsel %vm704, %v1038, 0.0
    %v1071 = vsel %vm704, %v1039, 0.0
    %v1072 = vsel %vm704, %v1040, 0.0
    %v1073 = vsel %vm704, %v1041, 0.0
    %v1074 = vsel %vm704, %v1042, 0.0
    %v1075 = vsel %vm704, %v1043, 0.0
    %v1076 = vsel %vm704, %v1044, 0.0
    %v1077 = vsel %vm704, %v1045, 0.0
    %v1078 = vsel %vm704, %v1046, 0.0
    %v1079 = vsel %vm704, %v1047, 0.0
    %v1080 = vsel %vm704, %v1048, 0.0
    %v1081 = vsel %vm704, %v1049, 0.0
    %v1082 = vsel %vm704, %v1050, 0.0
    %v1083 = vsel %vm704, %v1051, 0.0
    %v1084 = vsel %vm704, %v1052, 0.0
    %v1085 = vsel %vm704, %v1053, 0.0
    %v1086 = vsel %vm704, %v1054, 0.0
    %v1087 = vsel %vm704, %v1055, 0.0
    %v1088 = vsel %vm704, %v1056, 0.0
    %1089 = vst [vmem:[%s3] sm:$0xff] %v1057
    %1090 = vst [vmem:[%s3 + $0x8] sm:$0xff] %v1058
    %1091 = vst [vmem:[%s3 + $0x10] sm:$0xff] %v1059
    %1092 = vst [vmem:[%s3 + $0x18] sm:$0xff] %v1060
    %1093 = vst [vmem:[%s3 + $0x20] sm:$0xff] %v1061
    %1094 = vst [vmem:[%s3 + $0x28] sm:$0xff] %v1062
    %1095 = vst [vmem:[%s3 + $0x30] sm:$0xff] %v1063
    %1096 = vst [vmem:[%s3 + $0x38] sm:$0xff] %v1064
    %1097 = vst [vmem:[%s3 + $0x40] sm:$0xff] %v1065
    %1098 = vst [vmem:[%s3 + $0x48] sm:$0xff] %v1066
    %1099 = vst [vmem:[%s3 + $0x50] sm:$0xff] %v1067
    %1100 = vst [vmem:[%s3 + $0x58] sm:$0xff] %v1068
    %1101 = vst [vmem:[%s3 + $0x60] sm:$0xff] %v1069
    %1102 = vst [vmem:[%s3 + $0x68] sm:$0xff] %v1070
    %1103 = vst [vmem:[%s3 + $0x70] sm:$0xff] %v1071
    %1104 = vst [vmem:[%s3 + $0x78] sm:$0xff] %v1072
    %1105 = vst [vmem:[%s3 + $0x80] sm:$0xff] %v1073
    %1106 = vst [vmem:[%s3 + $0x88] sm:$0xff] %v1074
    %1107 = vst [vmem:[%s3 + $0x90] sm:$0xff] %v1075
    %1108 = vst [vmem:[%s3 + $0x98] sm:$0xff] %v1076
    %1109 = vst [vmem:[%s3 + $0xa0] sm:$0xff] %v1077
    %1110 = vst [vmem:[%s3 + $0xa8] sm:$0xff] %v1078
    %1111 = vst [vmem:[%s3 + $0xb0] sm:$0xff] %v1079
    %1112 = vst [vmem:[%s3 + $0xb8] sm:$0xff] %v1080
    %1113 = vst [vmem:[%s3 + $0xc0] sm:$0xff] %v1081
    %1114 = vst [vmem:[%s3 + $0xc8] sm:$0xff] %v1082
    %1115 = vst [vmem:[%s3 + $0xd0] sm:$0xff] %v1083
    %1116 = vst [vmem:[%s3 + $0xd8] sm:$0xff] %v1084
    %1117 = vst [vmem:[%s3 + $0xe0] sm:$0xff] %v1085
    %1118 = vst [vmem:[%s3 + $0xe8] sm:$0xff] %v1086
    %1119 = vst [vmem:[%s3 + $0xf0] sm:$0xff] %v1087
    %1120 = vst [vmem:[%s3 + $0xf8] sm:$0xff] %v1088
  $region21: #{gcn_forward.11} parent=0 // pred_fallthru
    _
  // Predicated region
  $region22: #{gcn_forward.11} parent=0 // pred_check
    _
  $region23: #{gcn_forward.11} parent=0 // pred_check_branch
    %1122 = sbr.rel (0) target = $region25
  $region24: #{gcn_forward.11} parent=0 // pred_region
    _
  $region25: #{gcn_forward.11} parent=0 // pred_fallthru
    _
  // Predicated region
  $region26: #{gcn_forward.11} parent=0 // pred_check
    _
  $region27: #{gcn_forward.11} parent=0 // pred_check_branch
    %1124 = sbr.rel (0) target = $region29
  $region28: #{gcn_forward.11} parent=0 // pred_region
    _
  $region29: #{gcn_forward.11} parent=0 // pred_fallthru
    _

// kernel: gcn_forward.7
$region0: #{gcn_forward.7}
  #allocation0 [shape = 'u32[]', space=smem, size = 0x4, offset = 0x4, fixed_abs, tag = 'smem constant byte address 0x4 - core index']
  #allocation1 [shape = 'u32[144,128]{1,0:T(1,128)}', space=vmem, size = 0x12000, scoped, tag = 'internal scratch']
  #allocation2 [shape = 'f32[256,128]{1,0:T(8,128)}', space=vmem, size = 0x20000, scoped, tag = 'scratch operand']
  %s0 = inlined_call_operand.vmem [shape: bf16[256,256], index: 0, kind: input, shape index: {}]
  %s1 = inlined_call_operand.vmem [shape: bf16[256,128], index: 1, kind: input, shape index: {}]
  %s2 = inlined_call_operand.vmem [shape: f32[1,128], index: 2, kind: input, shape index: {}]
  %s3 = inlined_call_operand.vmem [shape: bf16[256,128], index: 3, kind: output, shape index: {}]
  %s4 = sld [smem:[#allocation0]]
  $region30: #{gcn_forward.7} parent=0
    _
  %s6 = ssub.s32 1, %s4
  %s7 = scalar_select 0, %s6, %s4
  // Predicated region
  $region2: #{gcn_forward.7} parent=0 // pred_check
    _
  $region3: #{gcn_forward.7} parent=0 // pred_check_branch
    %9 = sbr.rel (0) target = $region5
  $region4: #{gcn_forward.7} parent=0 // pred_region
    _
  $region5: #{gcn_forward.7} parent=0 // pred_fallthru
    _
  // Predicated region
  $region6: #{gcn_forward.7} parent=0 // pred_check
    _
  $region7: #{gcn_forward.7} parent=0 // pred_check_branch
    %11 = sbr.rel (0) target = $region9
  $region8: #{gcn_forward.7} parent=0 // pred_region
    _
  $region9: #{gcn_forward.7} parent=0 // pred_fallthru
    _
  // Predicated region
  $region10: #{gcn_forward.7} parent=0 // pred_check
    _
  $region11: #{gcn_forward.7} parent=0 // pred_check_branch
    %13 = sbr.rel (0) target = $region13
  $region12: #{gcn_forward.7} parent=0 // pred_region
    _
  $region13: #{gcn_forward.7} parent=0 // pred_fallthru
    _
  %p15 = scmp.eq.s32.totalorder 0, 0
  // Predicated region
  $region14: #{gcn_forward.7} parent=0 // pred_check
    %p16 = pneg %p15
  $region15: #{gcn_forward.7} parent=0 // pred_check_branch
    %18 = sbr.rel (%p16) target = $region17
  $region16: #{gcn_forward.7} parent=0 // pred_region
    %19 = vst [vmem:[#allocation2] sm:$0xff] 0.0
    %20 = vst [vmem:[#allocation2 + $0x8] sm:$0xff] 0.0
    %21 = vst [vmem:[#allocation2 + $0x10] sm:$0xff] 0.0
    %22 = vst [vmem:[#allocation2 + $0x18] sm:$0xff] 0.0
    %23 = vst [vmem:[#allocation2 + $0x20] sm:$0xff] 0.0
    %24 = vst [vmem:[#allocation2 + $0x28] sm:$0xff] 0.0
    %25 = vst [vmem:[#allocation2 + $0x30] sm:$0xff] 0.0
    %26 = vst [vmem:[#allocation2 + $0x38] sm:$0xff] 0.0
    %27 = vst [vmem:[#allocation2 + $0x40] sm:$0xff] 0.0
    %28 = vst [vmem:[#allocation2 + $0x48] sm:$0xff] 0.0
    %29 = vst [vmem:[#allocation2 + $0x50] sm:$0xff] 0.0
    %30 = vst [vmem:[#allocation2 + $0x58] sm:$0xff] 0.0
    %31 = vst [vmem:[#allocation2 + $0x60] sm:$0xff] 0.0
    %32 = vst [vmem:[#allocation2 + $0x68] sm:$0xff] 0.0
    %33 = vst [vmem:[#allocation2 + $0x70] sm:$0xff] 0.0
    %34 = vst [vmem:[#allocation2 + $0x78] sm:$0xff] 0.0
    %35 = vst [vmem:[#allocation2 + $0x80] sm:$0xff] 0.0
    %36 = vst [vmem:[#allocation2 + $0x88] sm:$0xff] 0.0
    %37 = vst [vmem:[#allocation2 + $0x90] sm:$0xff] 0.0
    %38 = vst [vmem:[#allocation2 + $0x98] sm:$0xff] 0.0
    %39 = vst [vmem:[#allocation2 + $0xa0] sm:$0xff] 0.0
    %40 = vst [vmem:[#allocation2 + $0xa8] sm:$0xff] 0.0
    %41 = vst [vmem:[#allocation2 + $0xb0] sm:$0xff] 0.0
    %42 = vst [vmem:[#allocation2 + $0xb8] sm:$0xff] 0.0
    %43 = vst [vmem:[#allocation2 + $0xc0] sm:$0xff] 0.0
    %44 = vst [vmem:[#allocation2 + $0xc8] sm:$0xff] 0.0
    %45 = vst [vmem:[#allocation2 + $0xd0] sm:$0xff] 0.0
    %46 = vst [vmem:[#allocation2 + $0xd8] sm:$0xff] 0.0
    %47 = vst [vmem:[#allocation2 + $0xe0] sm:$0xff] 0.0
    %48 = vst [vmem:[#allocation2 + $0xe8] sm:$0xff] 0.0
    %49 = vst [vmem:[#allocation2 + $0xf0] sm:$0xff] 0.0
    %50 = vst [vmem:[#allocation2 + $0xf8] sm:$0xff] 0.0
  $region17: #{gcn_forward.7} parent=0 // pred_fallthru
    _
  %v51 = vld [vmem:[#allocation2] sm:$0xff]
  %v52 = vld [vmem:[#allocation2 + $0x8] sm:$0xff]
  %v53 = vld [vmem:[#allocation2 + $0x10] sm:$0xff]
  %v54 = vld [vmem:[#allocation2 + $0x18] sm:$0xff]
  %v55 = vld [vmem:[#allocation2 + $0x20] sm:$0xff]
  %v56 = vld [vmem:[#allocation2 + $0x28] sm:$0xff]
  %v57 = vld [vmem:[#allocation2 + $0x30] sm:$0xff]
  %v58 = vld [vmem:[#allocation2 + $0x38] sm:$0xff]
  %v59 = vld [vmem:[#allocation2 + $0x40] sm:$0xff]
  %v60 = vld [vmem:[#allocation2 + $0x48] sm:$0xff]
  %v61 = vld [vmem:[#allocation2 + $0x50] sm:$0xff]
  %v62 = vld [vmem:[#allocation2 + $0x58] sm:$0xff]
  %v63 = vld [vmem:[#allocation2 + $0x60] sm:$0xff]
  %v64 = vld [vmem:[#allocation2 + $0x68] sm:$0xff]
  %v65 = vld [vmem:[#allocation2 + $0x70] sm:$0xff]
  %v66 = vld [vmem:[#allocation2 + $0x78] sm:$0xff]
  %v67 = vld [vmem:[#allocation2 + $0x80] sm:$0xff]
  %v68 = vld [vmem:[#allocation2 + $0x88] sm:$0xff]
  %v69 = vld [vmem:[#allocation2 + $0x90] sm:$0xff]
  %v70 = vld [vmem:[#allocation2 + $0x98] sm:$0xff]
  %v71 = vld [vmem:[#allocation2 + $0xa0] sm:$0xff]
  %v72 = vld [vmem:[#allocation2 + $0xa8] sm:$0xff]
  %v73 = vld [vmem:[#allocation2 + $0xb0] sm:$0xff]
  %v74 = vld [vmem:[#allocation2 + $0xb8] sm:$0xff]
  %v75 = vld [vmem:[#allocation2 + $0xc0] sm:$0xff]
  %v76 = vld [vmem:[#allocation2 + $0xc8] sm:$0xff]
  %v77 = vld [vmem:[#allocation2 + $0xd0] sm:$0xff]
  %v78 = vld [vmem:[#allocation2 + $0xd8] sm:$0xff]
  %v79 = vld [vmem:[#allocation2 + $0xe0] sm:$0xff]
  %v80 = vld [vmem:[#allocation2 + $0xe8] sm:$0xff]
  %v81 = vld [vmem:[#allocation2 + $0xf0] sm:$0xff]
  %v82 = vld [vmem:[#allocation2 + $0xf8] sm:$0xff]
  %v83 = vld [vmem:[%s0] sm:$0xff]
  %v84 = vld [vmem:[%s0 + $0x8] sm:$0xff]
  %v85 = vld [vmem:[%s0 + $0x10] sm:$0xff]
  %v86 = vld [vmem:[%s0 + $0x18] sm:$0xff]
  %v87 = vld [vmem:[%s0 + $0x20] sm:$0xff]
  %v88 = vld [vmem:[%s0 + $0x28] sm:$0xff]
  %v89 = vld [vmem:[%s0 + $0x30] sm:$0xff]
  %v90 = vld [vmem:[%s0 + $0x38] sm:$0xff]
  %v91 = vld [vmem:[%s0 + $0x40] sm:$0xff]
  %v92 = vld [vmem:[%s0 + $0x48] sm:$0xff]
  %v93 = vld [vmem:[%s0 + $0x50] sm:$0xff]
  %v94 = vld [vmem:[%s0 + $0x58] sm:$0xff]
  %v95 = vld [vmem:[%s0 + $0x60] sm:$0xff]
  %v96 = vld [vmem:[%s0 + $0x68] sm:$0xff]
  %v97 = vld [vmem:[%s0 + $0x70] sm:$0xff]
  %v98 = vld [vmem:[%s0 + $0x78] sm:$0xff]
  %v99 = vld [vmem:[%s0 + $0x80] sm:$0xff]
  %v100 = vld [vmem:[%s0 + $0x88] sm:$0xff]
  %v101 = vld [vmem:[%s0 + $0x90] sm:$0xff]
  %v102 = vld [vmem:[%s0 + $0x98] sm:$0xff]
  %v103 = vld [vmem:[%s0 + $0xa0] sm:$0xff]
  %v104 = vld [vmem:[%s0 + $0xa8] sm:$0xff]
  %v105 = vld [vmem:[%s0 + $0xb0] sm:$0xff]
  %v106 = vld [vmem:[%s0 + $0xb8] sm:$0xff]
  %v107 = vld [vmem:[%s0 + $0xc0] sm:$0xff]
  %v108 = vld [vmem:[%s0 + $0xc8] sm:$0xff]
  %v109 = vld [vmem:[%s0 + $0xd0] sm:$0xff]
  %v110 = vld [vmem:[%s0 + $0xd8] sm:$0xff]
  %v111 = vld [vmem:[%s0 + $0xe0] sm:$0xff]
  %v112 = vld [vmem:[%s0 + $0xe8] sm:$0xff]
  %v113 = vld [vmem:[%s0 + $0xf0] sm:$0xff]
  %v114 = vld [vmem:[%s0 + $0xf8] sm:$0xff]
  %v115 = vld [vmem:[%s1] sm:$0xf]
  %v116 = vld [vmem:[%s1 + $0x4] sm:$0xf]
  %v117 = vld [vmem:[%s1 + $0x8] sm:$0xf]
  %v118 = vld [vmem:[%s1 + $0xc] sm:$0xf]
  %v119 = vld [vmem:[%s1 + $0x10] sm:$0xf]
  %v120 = vld [vmem:[%s1 + $0x14] sm:$0xf]
  %v121 = vld [vmem:[%s1 + $0x18] sm:$0xf]
  %v122 = vld [vmem:[%s1 + $0x1c] sm:$0xf]
  %v123 = vld [vmem:[%s1 + $0x20] sm:$0xf]
  %v124 = vld [vmem:[%s1 + $0x24] sm:$0xf]
  %v125 = vld [vmem:[%s1 + $0x28] sm:$0xf]
  %v126 = vld [vmem:[%s1 + $0x2c] sm:$0xf]
  %v127 = vld [vmem:[%s1 + $0x30] sm:$0xf]
  %v128 = vld [vmem:[%s1 + $0x34] sm:$0xf]
  %v129 = vld [vmem:[%s1 + $0x38] sm:$0xf]
  %v130 = vld [vmem:[%s1 + $0x3c] sm:$0xf]
  %v131 = vld [vmem:[%s1 + $0x40] sm:$0xf]
  %v132 = vld [vmem:[%s1 + $0x44] sm:$0xf]
  %v133 = vld [vmem:[%s1 + $0x48] sm:$0xf]
  %v134 = vld [vmem:[%s1 + $0x4c] sm:$0xf]
  %v135 = vld [vmem:[%s1 + $0x50] sm:$0xf]
  %v136 = vld [vmem:[%s1 + $0x54] sm:$0xf]
  %v137 = vld [vmem:[%s1 + $0x58] sm:$0xf]
  %v138 = vld [vmem:[%s1 + $0x5c] sm:$0xf]
  %v139 = vld [vmem:[%s1 + $0x60] sm:$0xf]
  %v140 = vld [vmem:[%s1 + $0x64] sm:$0xf]
  %v141 = vld [vmem:[%s1 + $0x68] sm:$0xf]
  %v142 = vld [vmem:[%s1 + $0x6c] sm:$0xf]
  %v143 = vld [vmem:[%s1 + $0x70] sm:$0xf]
  %v144 = vld [vmem:[%s1 + $0x74] sm:$0xf]
  %v145 = vld [vmem:[%s1 + $0x78] sm:$0xf]
  %v146 = vld [vmem:[%s1 + $0x7c] sm:$0xf]
  %v179 = vunpack.c.l.b16 %v83
  %v180 = vunpack.c.h.b16 %v83
  %v181 = vunpack.c.l.b16 %v84
  %v182 = vunpack.c.h.b16 %v84
  %v183 = vunpack.c.l.b16 %v85
  %v184 = vunpack.c.h.b16 %v85
  %v185 = vunpack.c.l.b16 %v86
  %v186 = vunpack.c.h.b16 %v86
  %v187 = vunpack.c.l.b16 %v87
  %v188 = vunpack.c.h.b16 %v87
  %v189 = vunpack.c.l.b16 %v88
  %v190 = vunpack.c.h.b16 %v88
  %v191 = vunpack.c.l.b16 %v89
  %v192 = vunpack.c.h.b16 %v89
  %v193 = vunpack.c.l.b16 %v90
  %v194 = vunpack.c.h.b16 %v90
  %v195 = vunpack.c.l.b16 %v91
  %v196 = vunpack.c.h.b16 %v91
  %v197 = vunpack.c.l.b16 %v92
  %v198 = vunpack.c.h.b16 %v92
  %v199 = vunpack.c.l.b16 %v93
  %v200 = vunpack.c.h.b16 %v93
  %v201 = vunpack.c.l.b16 %v94
  %v202 = vunpack.c.h.b16 %v94
  %v203 = vunpack.c.l.b16 %v95
  %v204 = vunpack.c.h.b16 %v95
  %v205 = vunpack.c.l.b16 %v96
  %v206 = vunpack.c.h.b16 %v96
  %v207 = vunpack.c.l.b16 %v97
  %v208 = vunpack.c.h.b16 %v97
  %v209 = vunpack.c.l.b16 %v98
  %v210 = vunpack.c.h.b16 %v98
  %v211 = vunpack.c.l.b16 %v99
  %v212 = vunpack.c.h.b16 %v99
  %v213 = vunpack.c.l.b16 %v100
  %v214 = vunpack.c.h.b16 %v100
  %v215 = vunpack.c.l.b16 %v101
  %v216 = vunpack.c.h.b16 %v101
  %v217 = vunpack.c.l.b16 %v102
  %v218 = vunpack.c.h.b16 %v102
  %v219 = vunpack.c.l.b16 %v103
  %v220 = vunpack.c.h.b16 %v103
  %v221 = vunpack.c.l.b16 %v104
  %v222 = vunpack.c.h.b16 %v104
  %v223 = vunpack.c.l.b16 %v105
  %v224 = vunpack.c.h.b16 %v105
  %v225 = vunpack.c.l.b16 %v106
  %v226 = vunpack.c.h.b16 %v106
  %v227 = vunpack.c.l.b16 %v107
  %v228 = vunpack.c.h.b16 %v107
  %v229 = vunpack.c.l.b16 %v108
  %v230 = vunpack.c.h.b16 %v108
  %v231 = vunpack.c.l.b16 %v109
  %v232 = vunpack.c.h.b16 %v109
  %v233 = vunpack.c.l.b16 %v110
  %v234 = vunpack.c.h.b16 %v110
  %v235 = vunpack.c.l.b16 %v111
  %v236 = vunpack.c.h.b16 %v111
  %v237 = vunpack.c.l.b16 %v112
  %v238 = vunpack.c.h.b16 %v112
  %v239 = vunpack.c.l.b16 %v113
  %v240 = vunpack.c.h.b16 %v113
  %v241 = vunpack.c.l.b16 %v114
  %v242 = vunpack.c.h.b16 %v114
  %v243 = vpack.c.b16 %v181, %v179
  %v244 = vpack.c.b16 %v182, %v180
  %v245 = vpack.c.b16 %v185, %v183
  %v246 = vpack.c.b16 %v186, %v184
  %v247 = vpack.c.b16 %v189, %v187
  %v248 = vpack.c.b16 %v190, %v188
  %v249 = vpack.c.b16 %v193, %v191
  %v250 = vpack.c.b16 %v194, %v192
  %v251 = vpack.c.b16 %v197, %v195
  %v252 = vpack.c.b16 %v198, %v196
  %v253 = vpack.c.b16 %v201, %v199
  %v254 = vpack.c.b16 %v202, %v200
  %v255 = vpack.c.b16 %v205, %v203
  %v256 = vpack.c.b16 %v206, %v204
  %v257 = vpack.c.b16 %v209, %v207
  %v258 = vpack.c.b16 %v210, %v208
  %v259 = vpack.c.b16 %v213, %v211
  %v260 = vpack.c.b16 %v214, %v212
  %v261 = vpack.c.b16 %v217, %v215
  %v262 = vpack.c.b16 %v218, %v216
  %v263 = vpack.c.b16 %v221, %v219
  %v264 = vpack.c.b16 %v222, %v220
  %v265 = vpack.c.b16 %v225, %v223
  %v266 = vpack.c.b16 %v226, %v224
  %v267 = vpack.c.b16 %v229, %v227
  %v268 = vpack.c.b16 %v230, %v228
  %v269 = vpack.c.b16 %v233, %v231
  %v270 = vpack.c.b16 %v234, %v232
  %v271 = vpack.c.b16 %v237, %v235
  %v272 = vpack.c.b16 %v238, %v236
  %v273 = vpack.c.b16 %v241, %v239
  %v274 = vpack.c.b16 %v242, %v240
  %v339 = vunpack.c.l.b16 %v115
  %v340 = vunpack.c.l.b16 %v116
  %v341 = vunpack.c.l.b16 %v117
  %v342 = vunpack.c.l.b16 %v118
  %v343 = vunpack.c.l.b16 %v119
  %v344 = vunpack.c.l.b16 %v120
  %v345 = vunpack.c.l.b16 %v121
  %v346 = vunpack.c.l.b16 %v122
  %v347 = vunpack.c.l.b16 %v123
  %v348 = vunpack.c.l.b16 %v124
  %v349 = vunpack.c.l.b16 %v125
  %v350 = vunpack.c.l.b16 %v126
  %v351 = vunpack.c.l.b16 %v127
  %v352 = vunpack.c.l.b16 %v128
  %v353 = vunpack.c.l.b16 %v129
  %v354 = vunpack.c.l.b16 %v130
  %v355 = vunpack.c.l.b16 %v131
  %v356 = vunpack.c.l.b16 %v132
  %v357 = vunpack.c.l.b16 %v133
  %v358 = vunpack.c.l.b16 %v134
  %v359 = vunpack.c.l.b16 %v135
  %v360 = vunpack.c.l.b16 %v136
  %v361 = vunpack.c.l.b16 %v137
  %v362 = vunpack.c.l.b16 %v138
  %v363 = vunpack.c.l.b16 %v139
  %v364 = vunpack.c.l.b16 %v140
  %v365 = vunpack.c.l.b16 %v141
  %v366 = vunpack.c.l.b16 %v142
  %v367 = vunpack.c.l.b16 %v143
  %v368 = vunpack.c.l.b16 %v144
  %v369 = vunpack.c.l.b16 %v145
  %v370 = vunpack.c.l.b16 %v146
  %v371 = vpack.c.b16 %v340, %v339
  %v372 = vpack.c.b16 %v342, %v341
  %v373 = vpack.c.b16 %v344, %v343
  %v374 = vpack.c.b16 %v346, %v345
  %v375 = vpack.c.b16 %v348, %v347
  %v376 = vpack.c.b16 %v350, %v349
  %v377 = vpack.c.b16 %v352, %v351
  %v378 = vpack.c.b16 %v354, %v353
  %v379 = vpack.c.b16 %v356, %v355
  %v380 = vpack.c.b16 %v358, %v357
  %v381 = vpack.c.b16 %v360, %v359
  %v382 = vpack.c.b16 %v362, %v361
  %v383 = vpack.c.b16 %v364, %v363
  %v384 = vpack.c.b16 %v366, %v365
  %v385 = vpack.c.b16 %v368, %v367
  %v386 = vpack.c.b16 %v370, %v369
  %403 = vmatprep.subr.bf16.mxu0 0
  %404 = vmatpush1.bf16.msra.mxu0 %v371
  %405 = vmatprep.subr.bf16.mxu0 0
  %406 = vmatpush1.bf16.msra.mxu0 %v372
  %407 = vmatprep.subr.bf16.mxu0 0
  %408 = vmatpush1.bf16.msra.mxu0 %v373
  %409 = vmatprep.subr.bf16.mxu0 0
  %410 = vmatpush1.bf16.msra.mxu0 %v374
  %411 = vmatprep.subr.bf16.mxu0 0
  %412 = vmatpush1.bf16.msra.mxu0 %v375
  %413 = vmatprep.subr.bf16.mxu0 0
  %414 = vmatpush1.bf16.msra.mxu0 %v376
  %415 = vmatprep.subr.bf16.mxu0 0
  %416 = vmatpush1.bf16.msra.mxu0 %v377
  %417 = vmatprep.subr.bf16.mxu0 0
  %418 = vmatpush1.bf16.msra.mxu0 %v378
  %419 = vmatprep.subr.bf16.mxu0 0
  %420 = vmatpush1.bf16.msra.mxu0 %v379
  %421 = vmatprep.subr.bf16.mxu0 0
  %422 = vmatpush1.bf16.msra.mxu0 %v380
  %423 = vmatprep.subr.bf16.mxu0 0
  %424 = vmatpush1.bf16.msra.mxu0 %v381
  %425 = vmatprep.subr.bf16.mxu0 0
  %426 = vmatpush1.bf16.msra.mxu0 %v382
  %427 = vmatprep.subr.bf16.mxu0 0
  %428 = vmatpush1.bf16.msra.mxu0 %v383
  %429 = vmatprep.subr.bf16.mxu0 0
  %430 = vmatpush1.bf16.msra.mxu0 %v384
  %431 = vmatprep.subr.bf16.mxu0 0
  %432 = vmatpush1.bf16.msra.mxu0 %v385
  %433 = vmatprep.subr.bf16.mxu0 0
  %434 = vmatpush1.bf16.msra.mxu0 %v386
  %435 = vmatprep.mubr.bf16.mxu0 %v244
  %436 = vmatmul.mubr.bf16.gmra.mrb[0].mxu0 %v243
  %v437 = vpop.f32.mrb[0].mxu0
  %v438 = vadd.f32 0.0, %v437
  %v439 = vpop.f32.mrb[0].mxu0
  %v440 = vpop.f32.mrb[0].mxu0
  %v441 = vadd.f32 0.0, %v440
  %v442 = vpop.f32.mrb[0].mxu0
  %443 = vmatprep.mubr.bf16.mxu0 %v246
  %444 = vmatmul.mubr.bf16.gmra.mrb[0].mxu0 %v245
  %v445 = vpop.f32.mrb[0].mxu0
  %v446 = vadd.f32 0.0, %v445
  %v447 = vpop.f32.mrb[0].mxu0
  %v448 = vpop.f32.mrb[0].mxu0
  %v449 = vadd.f32 0.0, %v448
  %v450 = vpop.f32.mrb[0].mxu0
  %451 = vmatprep.mubr.bf16.mxu0 %v248
  %452 = vmatmul.mubr.bf16.gmra.mrb[0].mxu0 %v247
  %v453 = vpop.f32.mrb[0].mxu0
  %v454 = vadd.f32 0.0, %v453
  %v455 = vpop.f32.mrb[0].mxu0
  %v456 = vpop.f32.mrb[0].mxu0
  %v457 = vadd.f32 0.0, %v456
  %v458 = vpop.f32.mrb[0].mxu0
  %459 = vmatprep.mubr.bf16.mxu0 %v250
  %460 = vmatmul.mubr.bf16.gmra.mrb[0].mxu0 %v249
  %v461 = vpop.f32.mrb[0].mxu0
  %v462 = vadd.f32 0.0, %v461
  %v463 = vpop.f32.mrb[0].mxu0
  %v464 = vpop.f32.mrb[0].mxu0
  %v465 = vadd.f32 0.0, %v464
  %v466 = vpop.f32.mrb[0].mxu0
  %467 = vmatprep.mubr.bf16.mxu0 %v252
  %468 = vmatmul.mubr.bf16.gmra.mrb[0].mxu0 %v251
  %v469 = vpop.f32.mrb[0].mxu0
  %v470 = vadd.f32 0.0, %v469
  %v471 = vpop.f32.mrb[0].mxu0
  %v472 = vpop.f32.mrb[0].mxu0
  %v473 = vadd.f32 0.0, %v472
  %v474 = vpop.f32.mrb[0].mxu0
  %475 = vmatprep.mubr.bf16.mxu0 %v254
  %476 = vmatmul.mubr.bf16.gmra.mrb[0].mxu0 %v253
  %v477 = vpop.f32.mrb[0].mxu0
  %v478 = vadd.f32 0.0, %v477
  %v479 = vpop.f32.mrb[0].mxu0
  %v480 = vpop.f32.mrb[0].mxu0
  %v481 = vadd.f32 0.0, %v480
  %v482 = vpop.f32.mrb[0].mxu0
  %483 = vmatprep.mubr.bf16.mxu0 %v256
  %484 = vmatmul.mubr.bf16.gmra.mrb[0].mxu0 %v255
  %v485 = vpop.f32.mrb[0].mxu0
  %v486 = vadd.f32 0.0, %v485
  %v487 = vpop.f32.mrb[0].mxu0
  %v488 = vpop.f32.mrb[0].mxu0
  %v489 = vadd.f32 0.0, %v488
  %v490 = vpop.f32.mrb[0].mxu0
  %491 = vmatprep.mubr.bf16.mxu0 %v258
  %492 = vmatmul.mubr.bf16.gmra.mrb[0].mxu0 %v257
  %v493 = vpop.f32.mrb[0].mxu0
  %v494 = vadd.f32 0.0, %v493
  %v495 = vpop.f32.mrb[0].mxu0
  %v496 = vpop.f32.mrb[0].mxu0
  %v497 = vadd.f32 0.0, %v496
  %v498 = vpop.f32.mrb[0].mxu0
  %499 = vmatprep.mubr.bf16.mxu0 %v260
  %500 = vmatmul.mubr.bf16.gmra.mrb[0].mxu0 %v259
  %v501 = vpop.f32.mrb[0].mxu0
  %v502 = vadd.f32 0.0, %v501
  %v503 = vpop.f32.mrb[0].mxu0
  %v504 = vpop.f32.mrb[0].mxu0
  %v505 = vadd.f32 0.0, %v504
  %v506 = vpop.f32.mrb[0].mxu0
  %507 = vmatprep.mubr.bf16.mxu0 %v262
  %508 = vmatmul.mubr.bf16.gmra.mrb[0].mxu0 %v261
  %v509 = vpop.f32.mrb[0].mxu0
  %v510 = vadd.f32 0.0, %v509
  %v511 = vpop.f32.mrb[0].mxu0
  %v512 = vpop.f32.mrb[0].mxu0
  %v513 = vadd.f32 0.0, %v512
  %v514 = vpop.f32.mrb[0].mxu0
  %515 = vmatprep.mubr.bf16.mxu0 %v264
  %516 = vmatmul.mubr.bf16.gmra.mrb[0].mxu0 %v263
  %v517 = vpop.f32.mrb[0].mxu0
  %v518 = vadd.f32 0.0, %v517
  %v519 = vpop.f32.mrb[0].mxu0
  %v520 = vpop.f32.mrb[0].mxu0
  %v521 = vadd.f32 0.0, %v520
  %v522 = vpop.f32.mrb[0].mxu0
  %523 = vmatprep.mubr.bf16.mxu0 %v266
  %524 = vmatmul.mubr.bf16.gmra.mrb[0].mxu0 %v265
  %v525 = vpop.f32.mrb[0].mxu0
  %v526 = vadd.f32 0.0, %v525
  %v527 = vpop.f32.mrb[0].mxu0
  %v528 = vpop.f32.mrb[0].mxu0
  %v529 = vadd.f32 0.0, %v528
  %v530 = vpop.f32.mrb[0].mxu0
  %531 = vmatprep.mubr.bf16.mxu0 %v268
  %532 = vmatmul.mubr.bf16.gmra.mrb[0].mxu0 %v267
  %v533 = vpop.f32.mrb[0].mxu0
  %v534 = vadd.f32 0.0, %v533
  %v535 = vpop.f32.mrb[0].mxu0
  %v536 = vpop.f32.mrb[0].mxu0
  %v537 = vadd.f32 0.0, %v536
  %v538 = vpop.f32.mrb[0].mxu0
  %539 = vmatprep.mubr.bf16.mxu0 %v270
  %540 = vmatmul.mubr.bf16.gmra.mrb[0].mxu0 %v269
  %v541 = vpop.f32.mrb[0].mxu0
  %v542 = vadd.f32 0.0, %v541
  %v543 = vpop.f32.mrb[0].mxu0
  %v544 = vpop.f32.mrb[0].mxu0
  %v545 = vadd.f32 0.0, %v544
  %v546 = vpop.f32.mrb[0].mxu0
  %547 = vmatprep.mubr.bf16.mxu0 %v272
  %548 = vmatmul.mubr.bf16.gmra.mrb[0].mxu0 %v271
  %v549 = vpop.f32.mrb[0].mxu0
  %v550 = vadd.f32 0.0, %v549
  %v551 = vpop.f32.mrb[0].mxu0
  %v552 = vpop.f32.mrb[0].mxu0
  %v553 = vadd.f32 0.0, %v552
  %v554 = vpop.f32.mrb[0].mxu0
  %555 = vmatprep.mubr.bf16.mxu0 %v274
  %556 = vmatmul.mubr.bf16.gmra.mrb[0].mxu0 %v273
  %v557 = vpop.f32.mrb[0].mxu0
  %v558 = vadd.f32 0.0, %v557
  %v559 = vpop.f32.mrb[0].mxu0
  %v560 = vpop.f32.mrb[0].mxu0
  %v561 = vadd.f32 0.0, %v560
  %v562 = vpop.f32.mrb[0].mxu0
  %563 = vdwg.mxu0
  %v564 = vadd.f32 %v51, %v438
  %v565 = vadd.f32 %v52, %v441
  %v566 = vadd.f32 %v53, %v446
  %v567 = vadd.f32 %v54, %v449
  %v568 = vadd.f32 %v55, %v454
  %v569 = vadd.f32 %v56, %v457
  %v570 = vadd.f32 %v57, %v462
  %v571 = vadd.f32 %v58, %v465
  %v572 = vadd.f32 %v59, %v470
  %v573 = vadd.f32 %v60, %v473
  %v574 = vadd.f32 %v61, %v478
  %v575 = vadd.f32 %v62, %v481
  %v576 = vadd.f32 %v63, %v486
  %v577 = vadd.f32 %v64, %v489
  %v578 = vadd.f32 %v65, %v494
  %v579 = vadd.f32 %v66, %v497
  %v580 = vadd.f32 %v67, %v502
  %v581 = vadd.f32 %v68, %v505
  %v582 = vadd.f32 %v69, %v510
  %v583 = vadd.f32 %v70, %v513
  %v584 = vadd.f32 %v71, %v518
  %v585 = vadd.f32 %v72, %v521
  %v586 = vadd.f32 %v73, %v526
  %v587 = vadd.f32 %v74, %v529
  %v588 = vadd.f32 %v75, %v534
  %v589 = vadd.f32 %v76, %v537
  %v590 = vadd.f32 %v77, %v542
  %v591 = vadd.f32 %v78, %v545
  %v592 = vadd.f32 %v79, %v550
  %v593 = vadd.f32 %v80, %v553
  %v594 = vadd.f32 %v81, %v558
  %v595 = vadd.f32 %v82, %v561
  %596 = vst [vmem:[#allocation2] sm:$0xff] %v564
  %597 = vst [vmem:[#allocation2 + $0x8] sm:$0xff] %v565
  %598 = vst [vmem:[#allocation2 + $0x10] sm:$0xff] %v566
  %599 = vst [vmem:[#allocation2 + $0x18] sm:$0xff] %v567
  %600 = vst [vmem:[#allocation2 + $0x20] sm:$0xff] %v568
  %601 = vst [vmem:[#allocation2 + $0x28] sm:$0xff] %v569
  %602 = vst [vmem:[#allocation2 + $0x30] sm:$0xff] %v570
  %603 = vst [vmem:[#allocation2 + $0x38] sm:$0xff] %v571
  %604 = vst [vmem:[#allocation2 + $0x40] sm:$0xff] %v572
  %605 = vst [vmem:[#allocation2 + $0x48] sm:$0xff] %v573
  %606 = vst [vmem:[#allocation2 + $0x50] sm:$0xff] %v574
  %607 = vst [vmem:[#allocation2 + $0x58] sm:$0xff] %v575
  %608 = vst [vmem:[#allocation2 + $0x60] sm:$0xff] %v576
  %609 = vst [vmem:[#allocation2 + $0x68] sm:$0xff] %v577
  %610 = vst [vmem:[#allocation2 + $0x70] sm:$0xff] %v578
  %611 = vst [vmem:[#allocation2 + $0x78] sm:$0xff] %v579
  %612 = vst [vmem:[#allocation2 + $0x80] sm:$0xff] %v580
  %613 = vst [vmem:[#allocation2 + $0x88] sm:$0xff] %v581
  %614 = vst [vmem:[#allocation2 + $0x90] sm:$0xff] %v582
  %615 = vst [vmem:[#allocation2 + $0x98] sm:$0xff] %v583
  %616 = vst [vmem:[#allocation2 + $0xa0] sm:$0xff] %v584
  %617 = vst [vmem:[#allocation2 + $0xa8] sm:$0xff] %v585
  %618 = vst [vmem:[#allocation2 + $0xb0] sm:$0xff] %v586
  %619 = vst [vmem:[#allocation2 + $0xb8] sm:$0xff] %v587
  %620 = vst [vmem:[#allocation2 + $0xc0] sm:$0xff] %v588
  %621 = vst [vmem:[#allocation2 + $0xc8] sm:$0xff] %v589
  %622 = vst [vmem:[#allocation2 + $0xd0] sm:$0xff] %v590
  %623 = vst [vmem:[#allocation2 + $0xd8] sm:$0xff] %v591
  %624 = vst [vmem:[#allocation2 + $0xe0] sm:$0xff] %v592
  %625 = vst [vmem:[#allocation2 + $0xe8] sm:$0xff] %v593
  %626 = vst [vmem:[#allocation2 + $0xf0] sm:$0xff] %v594
  %627 = vst [vmem:[#allocation2 + $0xf8] sm:$0xff] %v595
  // Predicated region
  $region18: #{gcn_forward.7} parent=0 // pred_check
    %p628 = pneg %p15
  $region19: #{gcn_forward.7} parent=0 // pred_check_branch
    %630 = sbr.rel (%p628) target = $region21
  $region20: #{gcn_forward.7} parent=0 // pred_region
    %v631 = vld [vmem:[#allocation2] sm:$0xff]
    %v632 = vld [vmem:[#allocation2 + $0x8] sm:$0xff]
    %v633 = vld [vmem:[#allocation2 + $0x10] sm:$0xff]
    %v634 = vld [vmem:[#allocation2 + $0x18] sm:$0xff]
    %v635 = vld [vmem:[#allocation2 + $0x20] sm:$0xff]
    %v636 = vld [vmem:[#allocation2 + $0x28] sm:$0xff]
    %v637 = vld [vmem:[#allocation2 + $0x30] sm:$0xff]
    %v638 = vld [vmem:[#allocation2 + $0x38] sm:$0xff]
    %v639 = vld [vmem:[#allocation2 + $0x40] sm:$0xff]
    %v640 = vld [vmem:[#allocation2 + $0x48] sm:$0xff]
    %v641 = vld [vmem:[#allocation2 + $0x50] sm:$0xff]
    %v642 = vld [vmem:[#allocation2 + $0x58] sm:$0xff]
    %v643 = vld [vmem:[#allocation2 + $0x60] sm:$0xff]
    %v644 = vld [vmem:[#allocation2 + $0x68] sm:$0xff]
    %v645 = vld [vmem:[#allocation2 + $0x70] sm:$0xff]
    %v646 = vld [vmem:[#allocation2 + $0x78] sm:$0xff]
    %v647 = vld [vmem:[#allocation2 + $0x80] sm:$0xff]
    %v648 = vld [vmem:[#allocation2 + $0x88] sm:$0xff]
    %v649 = vld [vmem:[#allocation2 + $0x90] sm:$0xff]
    %v650 = vld [vmem:[#allocation2 + $0x98] sm:$0xff]
    %v651 = vld [vmem:[#allocation2 + $0xa0] sm:$0xff]
    %v652 = vld [vmem:[#allocation2 + $0xa8] sm:$0xff]
    %v653 = vld [vmem:[#allocation2 + $0xb0] sm:$0xff]
    %v654 = vld [vmem:[#allocation2 + $0xb8] sm:$0xff]
    %v655 = vld [vmem:[#allocation2 + $0xc0] sm:$0xff]
    %v656 = vld [vmem:[#allocation2 + $0xc8] sm:$0xff]
    %v657 = vld [vmem:[#allocation2 + $0xd0] sm:$0xff]
    %v658 = vld [vmem:[#allocation2 + $0xd8] sm:$0xff]
    %v659 = vld [vmem:[#allocation2 + $0xe0] sm:$0xff]
    %v660 = vld [vmem:[#allocation2 + $0xe8] sm:$0xff]
    %v661 = vld [vmem:[#allocation2 + $0xf0] sm:$0xff]
    %v662 = vld [vmem:[#allocation2 + $0xf8] sm:$0xff]
    %v663 = vld [vmem:[%s2] sm:$0x1]
    %v665 = vlaneseq
    %v666 = vshrl.u32 %v665, 7
    %v667 = vsub.s32 0, %v666
    %v668 = vrot.slane %v663, %v667
    %v670 = vadd.f32 %v631, %v668
    %v671 = vadd.f32 %v632, %v668
    %v672 = vadd.f32 %v633, %v668
    %v673 = vadd.f32 %v634, %v668
    %v674 = vadd.f32 %v635, %v668
    %v675 = vadd.f32 %v636, %v668
    %v676 = vadd.f32 %v637, %v668
    %v677 = vadd.f32 %v638, %v668
    %v678 = vadd.f32 %v639, %v668
    %v679 = vadd.f32 %v640, %v668
    %v680 = vadd.f32 %v641, %v668
    %v681 = vadd.f32 %v642, %v668
    %v682 = vadd.f32 %v643, %v668
    %v683 = vadd.f32 %v644, %v668
    %v684 = vadd.f32 %v645, %v668
    %v685 = vadd.f32 %v646, %v668
    %v686 = vadd.f32 %v647, %v668
    %v687 = vadd.f32 %v648, %v668
    %v688 = vadd.f32 %v649, %v668
    %v689 = vadd.f32 %v650, %v668
    %v690 = vadd.f32 %v651, %v668
    %v691 = vadd.f32 %v652, %v668
    %v692 = vadd.f32 %v653, %v668
    %v693 = vadd.f32 %v654, %v668
    %v694 = vadd.f32 %v655, %v668
    %v695 = vadd.f32 %v656, %v668
    %v696 = vadd.f32 %v657, %v668
    %v697 = vadd.f32 %v658, %v668
    %v698 = vadd.f32 %v659, %v668
    %v699 = vadd.f32 %v660, %v668
    %v700 = vadd.f32 %v661, %v668
    %v701 = vadd.f32 %v662, %v668
    %v702 = vmax.f32 %v670, 0.0
    %v703 = vmax.f32 %v671, 0.0
    %v704 = vmax.f32 %v672, 0.0
    %v705 = vmax.f32 %v673, 0.0
    %v706 = vmax.f32 %v674, 0.0
    %v707 = vmax.f32 %v675, 0.0
    %v708 = vmax.f32 %v676, 0.0
    %v709 = vmax.f32 %v677, 0.0
    %v710 = vmax.f32 %v678, 0.0
    %v711 = vmax.f32 %v679, 0.0
    %v712 = vmax.f32 %v680, 0.0
    %v713 = vmax.f32 %v681, 0.0
    %v714 = vmax.f32 %v682, 0.0
    %v715 = vmax.f32 %v683, 0.0
    %v716 = vmax.f32 %v684, 0.0
    %v717 = vmax.f32 %v685, 0.0
    %v718 = vmax.f32 %v686, 0.0
    %v719 = vmax.f32 %v687, 0.0
    %v720 = vmax.f32 %v688, 0.0
    %v721 = vmax.f32 %v689, 0.0
    %v722 = vmax.f32 %v690, 0.0
    %v723 = vmax.f32 %v691, 0.0
    %v724 = vmax.f32 %v692, 0.0
    %v725 = vmax.f32 %v693, 0.0
    %v726 = vmax.f32 %v694, 0.0
    %v727 = vmax.f32 %v695, 0.0
    %v728 = vmax.f32 %v696, 0.0
    %v729 = vmax.f32 %v697, 0.0
    %v730 = vmax.f32 %v698, 0.0
    %v731 = vmax.f32 %v699, 0.0
    %v732 = vmax.f32 %v700, 0.0
    %v733 = vmax.f32 %v701, 0.0
    %v734 = vpack.c.bf16 %v703, %v702
    %v735 = vpack.c.bf16 %v705, %v704
    %v736 = vpack.c.bf16 %v707, %v706
    %v737 = vpack.c.bf16 %v709, %v708
    %v738 = vpack.c.bf16 %v711, %v710
    %v739 = vpack.c.bf16 %v713, %v712
    %v740 = vpack.c.bf16 %v715, %v714
    %v741 = vpack.c.bf16 %v717, %v716
    %v742 = vpack.c.bf16 %v719, %v718
    %v743 = vpack.c.bf16 %v721, %v720
    %v744 = vpack.c.bf16 %v723, %v722
    %v745 = vpack.c.bf16 %v725, %v724
    %v746 = vpack.c.bf16 %v727, %v726
    %v747 = vpack.c.bf16 %v729, %v728
    %v748 = vpack.c.bf16 %v731, %v730
    %v749 = vpack.c.bf16 %v733, %v732
    %v766 = vunpack.c.l.b16 %v734
    %v767 = vunpack.c.h.b16 %v734
    %v768 = vunpack.c.l.b16 %v735
    %v769 = vunpack.c.h.b16 %v735
    %v770 = vunpack.c.l.b16 %v736
    %v771 = vunpack.c.h.b16 %v736
    %v772 = vunpack.c.l.b16 %v737
    %v773 = vunpack.c.h.b16 %v737
    %v774 = vunpack.c.l.b16 %v738
    %v775 = vunpack.c.h.b16 %v738
    %v776 = vunpack.c.l.b16 %v739
    %v777 = vunpack.c.h.b16 %v739
    %v778 = vunpack.c.l.b16 %v740
    %v779 = vunpack.c.h.b16 %v740
    %v780 = vunpack.c.l.b16 %v741
    %v781 = vunpack.c.h.b16 %v741
    %v782 = vunpack.c.l.b16 %v742
    %v783 = vunpack.c.h.b16 %v742
    %v784 = vunpack.c.l.b16 %v743
    %v785 = vunpack.c.h.b16 %v743
    %v786 = vunpack.c.l.b16 %v744
    %v787 = vunpack.c.h.b16 %v744
    %v788 = vunpack.c.l.b16 %v745
    %v789 = vunpack.c.h.b16 %v745
    %v790 = vunpack.c.l.b16 %v746
    %v791 = vunpack.c.h.b16 %v746
    %v792 = vunpack.c.l.b16 %v747
    %v793 = vunpack.c.h.b16 %v747
    %v794 = vunpack.c.l.b16 %v748
    %v795 = vunpack.c.h.b16 %v748
    %v796 = vunpack.c.l.b16 %v749
    %v797 = vunpack.c.h.b16 %v749
    %v798 = vpack.c.b16 %v766, %v766
    %v799 = vpack.c.b16 %v767, %v767
    %v800 = vpack.c.b16 %v768, %v768
    %v801 = vpack.c.b16 %v769, %v769
    %v802 = vpack.c.b16 %v770, %v770
    %v803 = vpack.c.b16 %v771, %v771
    %v804 = vpack.c.b16 %v772, %v772
    %v805 = vpack.c.b16 %v773, %v773
    %v806 = vpack.c.b16 %v774, %v774
    %v807 = vpack.c.b16 %v775, %v775
    %v808 = vpack.c.b16 %v776, %v776
    %v809 = vpack.c.b16 %v777, %v777
    %v810 = vpack.c.b16 %v778, %v778
    %v811 = vpack.c.b16 %v779, %v779
    %v812 = vpack.c.b16 %v780, %v780
    %v813 = vpack.c.b16 %v781, %v781
    %v814 = vpack.c.b16 %v782, %v782
    %v815 = vpack.c.b16 %v783, %v783
    %v816 = vpack.c.b16 %v784, %v784
    %v817 = vpack.c.b16 %v785, %v785
    %v818 = vpack.c.b16 %v786, %v786
    %v819 = vpack.c.b16 %v787, %v787
    %v820 = vpack.c.b16 %v788, %v788
    %v821 = vpack.c.b16 %v789, %v789
    %v822 = vpack.c.b16 %v790, %v790
    %v823 = vpack.c.b16 %v791, %v791
    %v824 = vpack.c.b16 %v792, %v792
    %v825 = vpack.c.b16 %v793, %v793
    %v826 = vpack.c.b16 %v794, %v794
    %v827 = vpack.c.b16 %v795, %v795
    %v828 = vpack.c.b16 %v796, %v796
    %v829 = vpack.c.b16 %v797, %v797
    %862 = vst [vmem:[%s3] sm:$0xf] %v798
    %863 = vst [vmem:[%s3 + $0x4] sm:$0xf] %v799
    %864 = vst [vmem:[%s3 + $0x8] sm:$0xf] %v800
    %865 = vst [vmem:[%s3 + $0xc] sm:$0xf] %v801
    %866 = vst [vmem:[%s3 + $0x10] sm:$0xf] %v802
    %867 = vst [vmem:[%s3 + $0x14] sm:$0xf] %v803
    %868 = vst [vmem:[%s3 + $0x18] sm:$0xf] %v804
    %869 = vst [vmem:[%s3 + $0x1c] sm:$0xf] %v805
    %870 = vst [vmem:[%s3 + $0x20] sm:$0xf] %v806
    %871 = vst [vmem:[%s3 + $0x24] sm:$0xf] %v807
    %872 = vst [vmem:[%s3 + $0x28] sm:$0xf] %v808
    %873 = vst [vmem:[%s3 + $0x2c] sm:$0xf] %v809
    %874 = vst [vmem:[%s3 + $0x30] sm:$0xf] %v810
    %875 = vst [vmem:[%s3 + $0x34] sm:$0xf] %v811
    %876 = vst [vmem:[%s3 + $0x38] sm:$0xf] %v812
    %877 = vst [vmem:[%s3 + $0x3c] sm:$0xf] %v813
    %878 = vst [vmem:[%s3 + $0x40] sm:$0xf] %v814
    %879 = vst [vmem:[%s3 + $0x44] sm:$0xf] %v815
    %880 = vst [vmem:[%s3 + $0x48] sm:$0xf] %v816
    %881 = vst [vmem:[%s3 + $0x4c] sm:$0xf] %v817
    %882 = vst [vmem:[%s3 + $0x50] sm:$0xf] %v818
    %883 = vst [vmem:[%s3 + $0x54] sm:$0xf] %v819
    %884 = vst [vmem:[%s3 + $0x58] sm:$0xf] %v820
    %885 = vst [vmem:[%s3 + $0x5c] sm:$0xf] %v821
    %886 = vst [vmem:[%s3 + $0x60] sm:$0xf] %v822
    %887 = vst [vmem:[%s3 + $0x64] sm:$0xf] %v823
    %888 = vst [vmem:[%s3 + $0x68] sm:$0xf] %v824
    %889 = vst [vmem:[%s3 + $0x6c] sm:$0xf] %v825
    %890 = vst [vmem:[%s3 + $0x70] sm:$0xf] %v826
    %891 = vst [vmem:[%s3 + $0x74] sm:$0xf] %v827
    %892 = vst [vmem:[%s3 + $0x78] sm:$0xf] %v828
    %893 = vst [vmem:[%s3 + $0x7c] sm:$0xf] %v829
  $region21: #{gcn_forward.7} parent=0 // pred_fallthru
    _
  // Predicated region
  $region22: #{gcn_forward.7} parent=0 // pred_check
    _
  $region23: #{gcn_forward.7} parent=0 // pred_check_branch
    %895 = sbr.rel (0) target = $region25
  $region24: #{gcn_forward.7} parent=0 // pred_region
    _
  $region25: #{gcn_forward.7} parent=0 // pred_fallthru
    _
  // Predicated region
  $region26: #{gcn_forward.7} parent=0 // pred_check
    _
  $region27: #{gcn_forward.7} parent=0 // pred_check_branch
    %897 = sbr.rel (0) target = $region29
  $region28: #{gcn_forward.7} parent=0 // pred_region
    _
  $region29: #{gcn_forward.7} parent=0 // pred_fallthru
    _

</llo_original>
